<compile_context>
chip_gen: v7x
topology: tpu7x:2x2x1
jax: 0.10.0
libtpu: 0.0.40
codegen_flags: <defaults>
</compile_context>

<pallas_src>
import functools
import math

import numpy as np

import jax
import jax.numpy as jnp
from jax import lax
from jax.experimental import pallas as pl
from jax.experimental.pallas import tpu as pltpu


def _layernorm(x, gamma, beta, eps):
    mean = jnp.mean(x, axis=-1, keepdims=True)
    var = jnp.mean((x - mean) ** 2, axis=-1, keepdims=True)
    return (x - mean) * jax.lax.rsqrt(var + eps) * gamma + beta


def _gelu(x, exact):
    if exact:
        # torch nn.GELU default: 0.5 * x * (1 + erf(x / sqrt(2)))
        return 0.5 * x * (1.0 + jax.lax.erf(x * (1.0 / math.sqrt(2.0))))
    # tanh approximation (EUP); ~1e-3 max abs deviation from exact.
    c = math.sqrt(2.0 / math.pi)
    return 0.5 * x * (1.0 + jnp.tanh(c * (x + 0.044715 * x * x * x)))


def interact_layer_kernel(
    x_ref, kh_ref, vh_ref, bias_ref,
    wq_ref, bq_ref, wo_ref, bo_ref,
    ln1_g_ref, ln1_b_ref,
    w1_ref, b1_ref, w2_ref, b2_ref,
    ln2_g_ref, ln2_b_ref,
    out_ref,
    *, num_heads, exact_gelu, ffn_chunk, ln_eps,
):
    f32 = jnp.float32
    bf16 = jnp.bfloat16

    x = x_ref[0].astype(f32)          # (L, D)  residual path stays f32
    kh = kh_ref[0]                    # (H, Lg, hs) bf16, precomputed in wrapper
    vh = vh_ref[0]                    # (H, Lg, hs) bf16
    bias = bias_ref[0].astype(f32)    # (L, Lg)  additive mask bias: 0 or ~-1e9

    L, D = x.shape
    H = num_heads
    hs = D // H
    scale = 1.0 / math.sqrt(hs)

    # --- Q projection: bf16 MXU operands, f32 accumulation. Fold 1/sqrt(hs) into q
    # (L*D multiplies instead of H*L*Lg on the score tensor). ---
    q = jnp.dot(x.astype(bf16), wq_ref[...], preferred_element_type=f32) + bq_ref[...]
    qh = (q * scale).reshape(L, H, hs).astype(bf16)

    # --- batched-head attention against precomputed head-major K/V ---
    scores = jnp.einsum("lhd,hmd->hlm", qh, kh, preferred_element_type=f32)
    scores = scores + bias[None, :, :]                       # (H, L, Lg)

    m = jnp.max(scores, axis=-1, keepdims=True)
    e = jnp.exp(scores - m)
    denom = jnp.sum(e, axis=-1, keepdims=True)
    # approx reciprocal (EUP slot): ~1e-3-level relative error in probabilities.
    p = e * pl.reciprocal(denom, approx=True)

    ctx = jnp.einsum("hlm,hmd->lhd", p.astype(bf16), vh,
                     preferred_element_type=f32).reshape(L, D)

    attn_out = jnp.dot(ctx.astype(bf16), wo_ref[...],
                       preferred_element_type=f32) + bo_ref[...]

    # --- residual + pre layernorm (f32) ---
    y1 = _layernorm(attn_out + x, ln1_g_ref[...], ln1_b_ref[...], ln_eps)
    y1_bf = y1.astype(bf16)

    # --- position-wise FFN, chunked over d_ff so (L, d_ff) is never materialized.
    # fori_loop(unroll=True) bounds live ranges (a static Python loop does not). ---
    d_ff = w1_ref.shape[1]
    n_chunks = d_ff // ffn_chunk

    def ffn_body(c, acc):
        c0 = pl.multiple_of(c * ffn_chunk, ffn_chunk)
        h = jnp.dot(y1_bf, w1_ref[:, pl.ds(c0, ffn_chunk)],
                    preferred_element_type=f32) + b1_ref[:, pl.ds(c0, ffn_chunk)]
        h = _gelu(h, exact_gelu)                              # f32 elementwise
        return acc + jnp.dot(h.astype(bf16), w2_ref[pl.ds(c0, ffn_chunk), :],
                             preferred_element_type=f32)

    ffn = lax.fori_loop(0, n_chunks, ffn_body, jnp.zeros((L, D), f32), unroll=True)
    ffn = ffn + b2_ref[...]

    # --- residual + post layernorm ---
    y2 = _layernorm(ffn + y1, ln2_g_ref[...], ln2_b_ref[...], ln_eps)
    out_ref[0] = y2.astype(out_ref.dtype)


_KERNEL_PARAMS = ["wq", "bq", "wo", "bo", "ln1_g", "ln1_b",
                  "w1", "b1", "w2", "b2", "ln2_g", "ln2_b"]
_BF16_WEIGHTS = ("wq", "wo", "w1", "w2")


def _grid_const_spec(shape, ndim):
    """BlockSpec for a grid-constant block: single-buffered when supported."""
    idx = lambda b, t, nd=ndim: (0,) * nd
    buffered = getattr(pl, "Buffered", None)
    if buffered is not None:
        try:
            return pl.BlockSpec(shape, idx, pipeline_mode=buffered(1))
        except TypeError:
            pass
    return pl.BlockSpec(shape, idx)


def _vmem_capacity_bytes():
    try:
        return int(pltpu.get_tpu_info().vmem_capacity_bytes)
    except Exception:
        return 64 * 2**20      # conservative (v7x per-TC capacity)


def interact_layer(x, global_x, mask, sentence_length, params, num_heads,
                   *, exact_gelu=True, q_tile=None, ffn_chunk=512, ln_eps=1e-12):
    # sentence_length matches the torch signature but is unused by forward().
    del sentence_length
    B, L, D = x.shape
    Lg = global_x.shape[1]
    H = num_heads
    hs = D // H
    d_ff = params["w1"].shape[1]

    f32, bf16 = jnp.float32, jnp.bfloat16

    # Query tiling: second parallel grid axis (helps v7x's 2 TensorCores and bounds
    # per-step VMEM for long sequences).  On v6e, q_tile=256 / ffn_chunk=1024 fill
    # the 256-wide MXU better if VMEM allows.
    if q_tile is None:
        q_tile = 128 if (L % 128 == 0) else L
    assert L % q_tile == 0, "L must be divisible by q_tile"
    n_lt = L // q_tile

    ffn_chunk = min(ffn_chunk, d_ff)
    if d_ff % ffn_chunk != 0:
        g = math.gcd(d_ff, ffn_chunk)
        ffn_chunk = g if g >= 128 else d_ff

    # --- K/V projections hoisted out of the kernel: done once per batch (not once
    # per query tile), shipped head-major bf16. Plain XLA; fuses/hoists under jit. ---
    k = jnp.einsum("bld,de->ble", global_x.astype(f32), params["wk"].astype(f32)) + params["bk"]
    v = jnp.einsum("bld,de->ble", global_x.astype(f32), params["wv"].astype(f32)) + params["bv"]
    kh = k.reshape(B, Lg, H, hs).transpose(0, 2, 1, 3).astype(bf16)   # (B, H, Lg, hs)
    vh = v.reshape(B, Lg, H, hs).transpose(0, 2, 1, 3).astype(bf16)

    # Additive mask bias precomputed (1 = attend -> 0, 0 = masked -> -1e9), bf16.
    mask_bias = ((mask.astype(f32) - 1.0) * 1e9).astype(bf16)         # (B, L, Lg)

    # bf16 matmul weights (halves weight DMA + VMEM); biases / LN params stay f32.
    prepared = {}
    for name in _KERNEL_PARAMS:
        p = params[name]
        prepared[name] = p.astype(bf16) if name in _BF16_WEIGHTS else p.astype(f32)

    kernel = functools.partial(
        interact_layer_kernel,
        num_heads=H, exact_gelu=exact_gelu, ffn_chunk=ffn_chunk, ln_eps=ln_eps)

    args = [x, kh, vh, mask_bias]
    in_specs = [
        pl.BlockSpec((1, q_tile, D), lambda b, t: (b, t, 0)),
        pl.BlockSpec((1, H, Lg, hs), lambda b, t: (b, 0, 0, 0)),
        pl.BlockSpec((1, H, Lg, hs), lambda b, t: (b, 0, 0, 0)),
        pl.BlockSpec((1, q_tile, Lg), lambda b, t: (b, t, 0)),
    ]
    for name in _KERNEL_PARAMS:
        p = prepared[name]
        args.append(p)
        in_specs.append(_grid_const_spec(p.shape, p.ndim))

    # --- VMEM budget: single-buffered weights + double-buffered activation tiles
    # + in-kernel scratch estimate; clamp to chip capacity minus 8 MiB headroom. ---
    weight_bytes = sum(int(np.prod(p.shape)) * jnp.dtype(p.dtype).itemsize
                       for p in prepared.values())
    tile_bytes = (q_tile * D * 4            # x tile (f32)
                  + 2 * Lg * D * 2          # kh + vh (bf16)
                  + q_tile * Lg * 2         # mask bias (bf16)
                  + q_tile * D * 4)         # out tile (f32)
    scratch_bytes = 4 * (2 * H * q_tile * Lg                 # scores / probs (f32)
                         + 2 * q_tile * max(ffn_chunk, D)    # FFN chunk activations
                         + 6 * q_tile * D)                   # q/ctx/attn/y1/ffn temps
    budget = weight_bytes + 2 * tile_bytes + scratch_bytes
    cap = _vmem_capacity_bytes()
    vmem_limit = int(max(16 * 2**20, min(cap - 8 * 2**20, max(32 * 2**20, budget))))

    # Advisory cost estimate (kernel-side work only; K/V projection is outside).
    flops = int(2 * B * L * (2 * D * D + 2 * Lg * D + 2 * D * d_ff))
    transcendentals = int(B * (H * L * Lg + L * d_ff))
    bytes_accessed = int(x.size * 4 + kh.size * 2 + vh.size * 2 + mask_bias.size * 2
                         + B * L * D * 4 + weight_bytes)

    return pl.pallas_call(
        kernel,
        out_shape=jax.ShapeDtypeStruct((B, L, D), x.dtype),
        grid=(B, n_lt),
        in_specs=in_specs,
        out_specs=pl.BlockSpec((1, q_tile, D), lambda b, t: (b, t, 0)),
        compiler_params=pltpu.CompilerParams(
            dimension_semantics=("parallel", "parallel"),
            vmem_limit_bytes=vmem_limit,
        ),
        cost_estimate=pl.CostEstimate(flops=flops,
                                      transcendentals=transcendentals,
                                      bytes_accessed=bytes_accessed),
    )(*args)


def interact_layer_ref(x, global_x, mask, params, num_heads,
                       exact_gelu=True, ln_eps=1e-12):
    """Pure-JAX f32 reference of the same forward pass (for correctness check)."""
    def ln(v, g, b):
        mu = jnp.mean(v, axis=-1, keepdims=True)
        var = jnp.mean((v - mu) ** 2, axis=-1, keepdims=True)
        return (v - mu) * jax.lax.rsqrt(var + ln_eps) * g + b

    B, L, D = x.shape
    Lg = global_x.shape[1]
    H = num_heads
    hs = D // H
    q = jnp.einsum("bld,de->ble", x, params["wq"]) + params["bq"]
    k = jnp.einsum("bld,de->ble", global_x, params["wk"]) + params["bk"]
    v = jnp.einsum("bld,de->ble", global_x, params["wv"]) + params["bv"]
    q = q.reshape(B, L, H, hs)
    k = k.reshape(B, Lg, H, hs)
    v = v.reshape(B, Lg, H, hs)
    s = jnp.einsum("blhd,bmhd->bhlm", q, k) / math.sqrt(hs)
    s = s + jnp.where(mask[:, None, :, :] == 0, -1e9, 0.0)
    p = jax.nn.softmax(s, axis=-1)
    ctx = jnp.einsum("bhlm,bmhd->blhd", p, v).reshape(B, L, D)
    attn = jnp.einsum("bld,de->ble", ctx, params["wo"]) + params["bo"]
    y1 = ln(attn + x, params["ln1_g"], params["ln1_b"])
    h = jnp.einsum("bld,df->blf", y1, params["w1"]) + params["b1"]
    h = _gelu(h, exact_gelu)
    ffn = jnp.einsum("blf,fd->bld", h, params["w2"]) + params["b2"]
    return ln(ffn + y1, params["ln2_g"], params["ln2_b"])


def init_params(key, d_model, d_ff):
    ks = jax.random.split(key, 8)

    def lin(k, din, dout):
        w = jax.random.normal(k, (din, dout), jnp.float32) * 0.02
        b = jnp.zeros((1, dout), jnp.float32)
        return w, b

    wq, bq = lin(ks[0], d_model, d_model)
    wk, bk = lin(ks[1], d_model, d_model)
    wv, bv = lin(ks[2], d_model, d_model)
    wo, bo = lin(ks[3], d_model, d_model)
    w1, b1 = lin(ks[4], d_model, d_ff)
    w2, b2 = lin(ks[5], d_ff, d_model)
    return {
        "wq": wq, "bq": bq, "wk": wk, "bk": bk, "wv": wv, "bv": bv,
        "wo": wo, "bo": bo,
        "ln1_g": jnp.ones((1, d_model), jnp.float32),
        "ln1_b": jnp.zeros((1, d_model), jnp.float32),
        "w1": w1, "b1": b1, "w2": w2, "b2": b2,
        "ln2_g": jnp.ones((1, d_model), jnp.float32),
        "ln2_b": jnp.zeros((1, d_model), jnp.float32),
    }


if __name__ == "__main__":
    B, L, Lg, D, H = 2, 8, 8, 32, 4
    d_ff = 4 * D

    key = jax.random.PRNGKey(0)
    kx, kg, km, kp = jax.random.split(key, 4)

    x = jax.random.normal(kx, (B, L, D), jnp.float32)
    global_x = jax.random.normal(kg, (B, Lg, D), jnp.float32)
    # binary key mask (1 = attend, 0 = masked); guarantee at least one valid key per row
    mask = (jax.random.uniform(km, (B, L, Lg)) > 0.3).astype(jnp.float32)
    mask = mask.at[:, :, 0].set(1.0)
    sentence_length = jnp.full((B,), L, jnp.int32)   # unused by forward()

    params = init_params(kp, D, d_ff)

    out = interact_layer(x, global_x, mask, sentence_length, params, H)
    out = jax.block_until_ready(out)
    assert out.shape == (B, L, D)

    # correctness check against a pure-JAX f32 reference (loose tol: bf16 matmuls,
    # approx reciprocal in the softmax normalization)
    ref = interact_layer_ref(x, global_x, mask, params, H)
    np.testing.assert_allclose(np.asarray(out), np.asarray(ref), atol=5e-2, rtol=5e-2)

    print("KERNEL_OK")
</pallas_src>

<mosaic_0001>
module attributes {stable_mosaic.version = 11 : i64} {
  func.func @interact_layer_kernel(%arg0: i32, %arg1: i32, %arg2: memref<1x8x32xf32, #tpu.memory_space<vmem>>, %arg3: memref<1x4x8x8xbf16, #tpu.memory_space<vmem>>, %arg4: memref<1x4x8x8xbf16, #tpu.memory_space<vmem>>, %arg5: memref<1x8x8xbf16, #tpu.memory_space<vmem>>, %arg6: memref<32x32xbf16, #tpu.memory_space<vmem>>, %arg7: memref<1x32xf32, #tpu.memory_space<vmem>>, %arg8: memref<32x32xbf16, #tpu.memory_space<vmem>>, %arg9: memref<1x32xf32, #tpu.memory_space<vmem>>, %arg10: memref<1x32xf32, #tpu.memory_space<vmem>>, %arg11: memref<1x32xf32, #tpu.memory_space<vmem>>, %arg12: memref<32x128xbf16, #tpu.memory_space<vmem>>, %arg13: memref<1x128xf32, #tpu.memory_space<vmem>>, %arg14: memref<128x32xbf16, #tpu.memory_space<vmem>>, %arg15: memref<1x32xf32, #tpu.memory_space<vmem>>, %arg16: memref<1x32xf32, #tpu.memory_space<vmem>>, %arg17: memref<1x32xf32, #tpu.memory_space<vmem>>, %arg18: memref<1x8x32xf32, #tpu.memory_space<vmem>>) attributes {dimension_semantics = [#tpu.dimension_semantics<parallel>, #tpu.dimension_semantics<parallel>], iteration_bounds = array<i64: 2, 1>, scalar_prefetch = 0 : i64, scratch_operands = 0 : i64, tpu.core_type = #tpu.core_type<tc>, window_params = [{transform_indices = @transform_0, window_bounds = array<i64: 1, 8, 32>}, {transform_indices = @transform_1, window_bounds = array<i64: 1, 4, 8, 8>}, {transform_indices = @transform_2, window_bounds = array<i64: 1, 4, 8, 8>}, {transform_indices = @transform_3, window_bounds = array<i64: 1, 8, 8>}, {pipeline_mode = #tpu.pipeline_mode<synchronous>, transform_indices = @transform_4, window_bounds = array<i64: 32, 32>}, {pipeline_mode = #tpu.pipeline_mode<synchronous>, transform_indices = @transform_5, window_bounds = array<i64: 1, 32>}, {pipeline_mode = #tpu.pipeline_mode<synchronous>, transform_indices = @transform_6, window_bounds = array<i64: 32, 32>}, {pipeline_mode = #tpu.pipeline_mode<synchronous>, transform_indices = @transform_7, window_bounds = array<i64: 1, 32>}, {pipeline_mode = #tpu.pipeline_mode<synchronous>, transform_indices = @transform_8, window_bounds = array<i64: 1, 32>}, {pipeline_mode = #tpu.pipeline_mode<synchronous>, transform_indices = @transform_9, window_bounds = array<i64: 1, 32>}, {pipeline_mode = #tpu.pipeline_mode<synchronous>, transform_indices = @transform_10, window_bounds = array<i64: 32, 128>}, {pipeline_mode = #tpu.pipeline_mode<synchronous>, transform_indices = @transform_11, window_bounds = array<i64: 1, 128>}, {pipeline_mode = #tpu.pipeline_mode<synchronous>, transform_indices = @transform_12, window_bounds = array<i64: 128, 32>}, {pipeline_mode = #tpu.pipeline_mode<synchronous>, transform_indices = @transform_13, window_bounds = array<i64: 1, 32>}, {pipeline_mode = #tpu.pipeline_mode<synchronous>, transform_indices = @transform_14, window_bounds = array<i64: 1, 32>}, {pipeline_mode = #tpu.pipeline_mode<synchronous>, transform_indices = @transform_15, window_bounds = array<i64: 1, 32>}, {transform_indices = @transform_16, window_bounds = array<i64: 1, 8, 32>}]} {
    %c0 = arith.constant 0 : index
    %c0_0 = arith.constant 0 : index
    %c0_1 = arith.constant 0 : index
    %0 = vector.load %arg2[%c0, %c0_0, %c0_1] : memref<1x8x32xf32, #tpu.memory_space<vmem>>, vector<1x8x32xf32>
    %1 = vector.shape_cast %0 : vector<1x8x32xf32> to vector<8x32xf32>
    %c0_2 = arith.constant 0 : index
    %c0_3 = arith.constant 0 : index
    %c0_4 = arith.constant 0 : index
    %c0_5 = arith.constant 0 : index
    %2 = vector.load %arg3[%c0_2, %c0_3, %c0_4, %c0_5] : memref<1x4x8x8xbf16, #tpu.memory_space<vmem>>, vector<1x4x8x8xbf16>
    %3 = vector.shape_cast %2 : vector<1x4x8x8xbf16> to vector<4x8x8xbf16>
    %c0_6 = arith.constant 0 : index
    %c0_7 = arith.constant 0 : index
    %c0_8 = arith.constant 0 : index
    %c0_9 = arith.constant 0 : index
    %4 = vector.load %arg4[%c0_6, %c0_7, %c0_8, %c0_9] : memref<1x4x8x8xbf16, #tpu.memory_space<vmem>>, vector<1x4x8x8xbf16>
    %5 = vector.shape_cast %4 : vector<1x4x8x8xbf16> to vector<4x8x8xbf16>
    %c0_10 = arith.constant 0 : index
    %c0_11 = arith.constant 0 : index
    %c0_12 = arith.constant 0 : index
    %6 = vector.load %arg5[%c0_10, %c0_11, %c0_12] : memref<1x8x8xbf16, #tpu.memory_space<vmem>>, vector<1x8x8xbf16>
    %7 = vector.shape_cast %6 : vector<1x8x8xbf16> to vector<8x8xbf16>
    %8 = arith.extf %7 : vector<8x8xbf16> to vector<8x8xf32>
    %9 = arith.truncf %1 : vector<8x32xf32> to vector<8x32xbf16>
    %c0_13 = arith.constant 0 : index
    %c0_14 = arith.constant 0 : index
    %10 = vector.load %arg6[%c0_13, %c0_14] : memref<32x32xbf16, #tpu.memory_space<vmem>>, vector<32x32xbf16>
    %cst = arith.constant dense<0.000000e+00> : vector<8x32xf32>
    %11 = tpu.matmul %9, %10, %cst {dimension_numbers = #tpu.dot_dimension_numbers<[1], [0], [0], [1], [0, 0, 1, 1], [], []>} : vector<8x32xbf16>, vector<32x32xbf16>, vector<8x32xf32> -> vector<8x32xf32>
    %c0_15 = arith.constant 0 : index
    %c0_16 = arith.constant 0 : index
    %12 = vector.load %arg7[%c0_15, %c0_16] : memref<1x32xf32, #tpu.memory_space<vmem>>, vector<1x32xf32>
    %13 = vector.broadcast %12 : vector<1x32xf32> to vector<8x32xf32>
    %14 = arith.addf %11, %13 : vector<8x32xf32>
    %cst_17 = arith.constant 0.353553385 : f32
    %15 = vector.broadcast %cst_17 : f32 to vector<8x32xf32>
    %16 = arith.mulf %14, %15 : vector<8x32xf32>
    %17 = vector.shape_cast %16 : vector<8x32xf32> to vector<8x4x8xf32>
    %18 = arith.truncf %17 : vector<8x4x8xf32> to vector<8x4x8xbf16>
    "tpu.trace_start"() <{level = 10 : i32, message = "lhd,hmd->hlm"}> : () -> ()
    %cst_18 = arith.constant dense<0.000000e+00> : vector<4x8x8xf32>
    %19 = tpu.matmul %18, %3, %cst_18 {dimension_numbers = #tpu.dot_dimension_numbers<[2], [2], [0], [1], [0, 1, 0, 0, 1, 1], [1], [0]>} : vector<8x4x8xbf16>, vector<4x8x8xbf16>, vector<4x8x8xf32> -> vector<4x8x8xf32>
    "tpu.trace_stop"() : () -> ()
    %20 = vector.shape_cast %8 : vector<8x8xf32> to vector<1x8x8xf32>
    %21 = vector.broadcast %20 : vector<1x8x8xf32> to vector<4x8x8xf32>
    %22 = arith.addf %19, %21 : vector<4x8x8xf32>
    %cst_19 = arith.constant dense<0xFF800000> : vector<4x8xf32>
    %23 = vector.multi_reduction <maximumf>, %22, %cst_19 [2] : vector<4x8x8xf32> to vector<4x8xf32>
    %24 = vector.shape_cast %23 : vector<4x8xf32> to vector<4x8x1xf32>
    %25 = vector.broadcast %24 : vector<4x8x1xf32> to vector<4x8x8xf32>
    %26 = arith.subf %22, %25 : vector<4x8x8xf32>
    %27 = math.exp %26 : vector<4x8x8xf32>
    %cst_20 = arith.constant dense<0.000000e+00> : vector<4x8xf32>
    %28 = vector.multi_reduction <add>, %27, %cst_20 [2] : vector<4x8x8xf32> to vector<4x8xf32>
    %29 = vector.shape_cast %28 : vector<4x8xf32> to vector<4x8x1xf32>
    %30 = tpu.reciprocal %29 {approx = true} : vector<4x8x1xf32> -> vector<4x8x1xf32>
    %31 = vector.broadcast %30 : vector<4x8x1xf32> to vector<4x8x8xf32>
    %32 = arith.mulf %27, %31 : vector<4x8x8xf32>
    %33 = arith.truncf %32 : vector<4x8x8xf32> to vector<4x8x8xbf16>
    "tpu.trace_start"() <{level = 10 : i32, message = "hlm,hmd->lhd"}> : () -> ()
    %cst_21 = arith.constant dense<0.000000e+00> : vector<4x8x8xf32>
    %34 = tpu.matmul %5, %33, %cst_21 {dimension_numbers = #tpu.dot_dimension_numbers<[1], [2], [2], [1], [0, 0, 0, 2, 1, 1], [0], [0]>} : vector<4x8x8xbf16>, vector<4x8x8xbf16>, vector<4x8x8xf32> -> vector<4x8x8xf32>
    %35 = tpu.transpose %34, [2, 0, 1] : vector<4x8x8xf32> -> vector<8x4x8xf32>
    "tpu.trace_stop"() : () -> ()
    %36 = vector.shape_cast %35 : vector<8x4x8xf32> to vector<8x32xf32>
    %37 = arith.truncf %36 : vector<8x32xf32> to vector<8x32xbf16>
    %c0_22 = arith.constant 0 : index
    %c0_23 = arith.constant 0 : index
    %38 = vector.load %arg8[%c0_22, %c0_23] : memref<32x32xbf16, #tpu.memory_space<vmem>>, vector<32x32xbf16>
    %cst_24 = arith.constant dense<0.000000e+00> : vector<8x32xf32>
    %39 = tpu.matmul %37, %38, %cst_24 {dimension_numbers = #tpu.dot_dimension_numbers<[1], [0], [0], [1], [0, 0, 1, 1], [], []>} : vector<8x32xbf16>, vector<32x32xbf16>, vector<8x32xf32> -> vector<8x32xf32>
    %c0_25 = arith.constant 0 : index
    %c0_26 = arith.constant 0 : index
    %40 = vector.load %arg9[%c0_25, %c0_26] : memref<1x32xf32, #tpu.memory_space<vmem>>, vector<1x32xf32>
    %41 = vector.broadcast %40 : vector<1x32xf32> to vector<8x32xf32>
    %42 = arith.addf %39, %41 : vector<8x32xf32>
    %43 = arith.addf %42, %1 : vector<8x32xf32>
    %c0_27 = arith.constant 0 : index
    %c0_28 = arith.constant 0 : index
    %44 = vector.load %arg10[%c0_27, %c0_28] : memref<1x32xf32, #tpu.memory_space<vmem>>, vector<1x32xf32>
    %c0_29 = arith.constant 0 : index
    %c0_30 = arith.constant 0 : index
    %45 = vector.load %arg11[%c0_29, %c0_30] : memref<1x32xf32, #tpu.memory_space<vmem>>, vector<1x32xf32>
    %cst_31 = arith.constant dense<0.000000e+00> : vector<8xf32>
    %46 = vector.multi_reduction <add>, %43, %cst_31 [1] : vector<8x32xf32> to vector<8xf32>
    %47 = vector.shape_cast %46 : vector<8xf32> to vector<8x1xf32>
    %cst_32 = arith.constant 3.200000e+01 : f32
    %48 = vector.broadcast %cst_32 : f32 to vector<8x1xf32>
    %49 = arith.divf %47, %48 : vector<8x1xf32>
    %50 = vector.broadcast %49 : vector<8x1xf32> to vector<8x32xf32>
    %51 = arith.subf %43, %50 : vector<8x32xf32>
    %52 = arith.mulf %51, %51 : vector<8x32xf32>
    %cst_33 = arith.constant dense<0.000000e+00> : vector<8xf32>
    %53 = vector.multi_reduction <add>, %52, %cst_33 [1] : vector<8x32xf32> to vector<8xf32>
    %54 = vector.shape_cast %53 : vector<8xf32> to vector<8x1xf32>
    %cst_34 = arith.constant 3.200000e+01 : f32
    %55 = vector.broadcast %cst_34 : f32 to vector<8x1xf32>
    %56 = arith.divf %54, %55 : vector<8x1xf32>
    %57 = vector.broadcast %49 : vector<8x1xf32> to vector<8x32xf32>
    %58 = arith.subf %43, %57 : vector<8x32xf32>
    %cst_35 = arith.constant 9.99999996E-13 : f32
    %59 = vector.broadcast %cst_35 : f32 to vector<8x1xf32>
    %60 = arith.addf %56, %59 : vector<8x1xf32>
    %61 = math.rsqrt %60 : vector<8x1xf32>
    %62 = vector.broadcast %61 : vector<8x1xf32> to vector<8x32xf32>
    %63 = arith.mulf %58, %62 : vector<8x32xf32>
    %64 = vector.broadcast %44 : vector<1x32xf32> to vector<8x32xf32>
    %65 = arith.mulf %63, %64 : vector<8x32xf32>
    %66 = vector.broadcast %45 : vector<1x32xf32> to vector<8x32xf32>
    %67 = arith.addf %65, %66 : vector<8x32xf32>
    %68 = arith.truncf %67 : vector<8x32xf32> to vector<8x32xbf16>
    %cst_36 = arith.constant 0.000000e+00 : f32
    %69 = vector.broadcast %cst_36 : f32 to vector<8x32xf32>
    %c0_i32 = arith.constant 0 : i32
    %c128_i32 = arith.constant 128 : i32
    %70 = arith.muli %c0_i32, %c128_i32 : i32
    %71 = tpu.assume_multiple %70, 128 : i32
    %c0_37 = arith.constant 0 : index
    %72 = arith.index_cast %71 : i32 to index
    %73 = vector.load %arg12[%c0_37, %72] : memref<32x128xbf16, #tpu.memory_space<vmem>>, vector<32x128xbf16>
    %cst_38 = arith.constant dense<0.000000e+00> : vector<8x128xf32>
    %74 = tpu.matmul %68, %73, %cst_38 {dimension_numbers = #tpu.dot_dimension_numbers<[1], [0], [0], [1], [0, 0, 1, 1], [], []>} : vector<8x32xbf16>, vector<32x128xbf16>, vector<8x128xf32> -> vector<8x128xf32>
    %c0_39 = arith.constant 0 : index
    %75 = arith.index_cast %71 : i32 to index
    %76 = vector.load %arg13[%c0_39, %75] : memref<1x128xf32, #tpu.memory_space<vmem>>, vector<1x128xf32>
    %77 = vector.broadcast %76 : vector<1x128xf32> to vector<8x128xf32>
    %78 = arith.addf %74, %77 : vector<8x128xf32>
    %cst_40 = arith.constant 5.000000e-01 : f32
    %79 = vector.broadcast %cst_40 : f32 to vector<8x128xf32>
    %80 = arith.mulf %79, %78 : vector<8x128xf32>
    %cst_41 = arith.constant 0.707106769 : f32
    %81 = vector.broadcast %cst_41 : f32 to vector<8x128xf32>
    %82 = arith.mulf %78, %81 : vector<8x128xf32>
    %83 = math.erf %82 : vector<8x128xf32>
    %cst_42 = arith.constant 1.000000e+00 : f32
    %84 = vector.broadcast %cst_42 : f32 to vector<8x128xf32>
    %85 = arith.addf %84, %83 : vector<8x128xf32>
    %86 = arith.mulf %80, %85 : vector<8x128xf32>
    %87 = arith.truncf %86 : vector<8x128xf32> to vector<8x128xbf16>
    %88 = arith.index_cast %71 : i32 to index
    %c0_43 = arith.constant 0 : index
    %89 = vector.load %arg14[%88, %c0_43] : memref<128x32xbf16, #tpu.memory_space<vmem>>, vector<128x32xbf16>
    %cst_44 = arith.constant dense<0.000000e+00> : vector<8x32xf32>
    %90 = tpu.matmul %87, %89, %cst_44 {dimension_numbers = #tpu.dot_dimension_numbers<[1], [0], [0], [1], [0, 0, 1, 1], [], []>} : vector<8x128xbf16>, vector<128x32xbf16>, vector<8x32xf32> -> vector<8x32xf32>
    %91 = arith.addf %69, %90 : vector<8x32xf32>
    %c1_i32 = arith.constant 1 : i32
    %c0_45 = arith.constant 0 : index
    %c0_46 = arith.constant 0 : index
    %92 = vector.load %arg15[%c0_45, %c0_46] : memref<1x32xf32, #tpu.memory_space<vmem>>, vector<1x32xf32>
    %93 = vector.broadcast %92 : vector<1x32xf32> to vector<8x32xf32>
    %94 = arith.addf %91, %93 : vector<8x32xf32>
    %95 = arith.addf %94, %67 : vector<8x32xf32>
    %c0_47 = arith.constant 0 : index
    %c0_48 = arith.constant 0 : index
    %96 = vector.load %arg16[%c0_47, %c0_48] : memref<1x32xf32, #tpu.memory_space<vmem>>, vector<1x32xf32>
    %c0_49 = arith.constant 0 : index
    %c0_50 = arith.constant 0 : index
    %97 = vector.load %arg17[%c0_49, %c0_50] : memref<1x32xf32, #tpu.memory_space<vmem>>, vector<1x32xf32>
    %cst_51 = arith.constant dense<0.000000e+00> : vector<8xf32>
    %98 = vector.multi_reduction <add>, %95, %cst_51 [1] : vector<8x32xf32> to vector<8xf32>
    %99 = vector.shape_cast %98 : vector<8xf32> to vector<8x1xf32>
    %cst_52 = arith.constant 3.200000e+01 : f32
    %100 = vector.broadcast %cst_52 : f32 to vector<8x1xf32>
    %101 = arith.divf %99, %100 : vector<8x1xf32>
    %102 = vector.broadcast %101 : vector<8x1xf32> to vector<8x32xf32>
    %103 = arith.subf %95, %102 : vector<8x32xf32>
    %104 = arith.mulf %103, %103 : vector<8x32xf32>
    %cst_53 = arith.constant dense<0.000000e+00> : vector<8xf32>
    %105 = vector.multi_reduction <add>, %104, %cst_53 [1] : vector<8x32xf32> to vector<8xf32>
    %106 = vector.shape_cast %105 : vector<8xf32> to vector<8x1xf32>
    %cst_54 = arith.constant 3.200000e+01 : f32
    %107 = vector.broadcast %cst_54 : f32 to vector<8x1xf32>
    %108 = arith.divf %106, %107 : vector<8x1xf32>
    %109 = vector.broadcast %101 : vector<8x1xf32> to vector<8x32xf32>
    %110 = arith.subf %95, %109 : vector<8x32xf32>
    %cst_55 = arith.constant 9.99999996E-13 : f32
    %111 = vector.broadcast %cst_55 : f32 to vector<8x1xf32>
    %112 = arith.addf %108, %111 : vector<8x1xf32>
    %113 = math.rsqrt %112 : vector<8x1xf32>
    %114 = vector.broadcast %113 : vector<8x1xf32> to vector<8x32xf32>
    %115 = arith.mulf %110, %114 : vector<8x32xf32>
    %116 = vector.broadcast %96 : vector<1x32xf32> to vector<8x32xf32>
    %117 = arith.mulf %115, %116 : vector<8x32xf32>
    %118 = vector.broadcast %97 : vector<1x32xf32> to vector<8x32xf32>
    %119 = arith.addf %117, %118 : vector<8x32xf32>
    %c0_56 = arith.constant 0 : index
    %c0_57 = arith.constant 0 : index
    %c0_58 = arith.constant 0 : index
    %120 = vector.load %arg18[%c0_56, %c0_57, %c0_58] : memref<1x8x32xf32, #tpu.memory_space<vmem>>, vector<1x8x32xf32>
    %121 = vector.shape_cast %120 : vector<1x8x32xf32> to vector<8x32xf32>
    %122 = vector.shape_cast %119 : vector<8x32xf32> to vector<1x8x32xf32>
    tpu.vector_store %arg18[%c0_56, %c0_57, %c0_58], %122 {strides = array<i32>} : memref<1x8x32xf32, #tpu.memory_space<vmem>>, vector<1x8x32xf32>,
    return
  }
  func.func @transform_0(%arg0: i32, %arg1: i32) -> (i32, i32, i32) {
    %c0_i32 = arith.constant 0 : i32
    %c0_i32_0 = arith.constant 0 : i32
    return %arg0, %arg1, %c0_i32 : i32, i32, i32
  }
  func.func @transform_1(%arg0: i32, %arg1: i32) -> (i32, i32, i32, i32) {
    %c0_i32 = arith.constant 0 : i32
    %c0_i32_0 = arith.constant 0 : i32
    %c0_i32_1 = arith.constant 0 : i32
    %c0_i32_2 = arith.constant 0 : i32
    return %arg0, %c0_i32, %c0_i32_0, %c0_i32_1 : i32, i32, i32, i32
  }
  func.func @transform_2(%arg0: i32, %arg1: i32) -> (i32, i32, i32, i32) {
    %c0_i32 = arith.constant 0 : i32
    %c0_i32_0 = arith.constant 0 : i32
    %c0_i32_1 = arith.constant 0 : i32
    %c0_i32_2 = arith.constant 0 : i32
    return %arg0, %c0_i32, %c0_i32_0, %c0_i32_1 : i32, i32, i32, i32
  }
  func.func @transform_3(%arg0: i32, %arg1: i32) -> (i32, i32, i32) {
    %c0_i32 = arith.constant 0 : i32
    %c0_i32_0 = arith.constant 0 : i32
    return %arg0, %arg1, %c0_i32 : i32, i32, i32
  }
  func.func @transform_4(%arg0: i32, %arg1: i32) -> (i32, i32) {
    %c0_i32 = arith.constant 0 : i32
    %c0_i32_0 = arith.constant 0 : i32
    %c0_i32_1 = arith.constant 0 : i32
    return %c0_i32, %c0_i32_0 : i32, i32
  }
  func.func @transform_5(%arg0: i32, %arg1: i32) -> (i32, i32) {
    %c0_i32 = arith.constant 0 : i32
    %c0_i32_0 = arith.constant 0 : i32
    %c0_i32_1 = arith.constant 0 : i32
    return %c0_i32, %c0_i32_0 : i32, i32
  }
  func.func @transform_6(%arg0: i32, %arg1: i32) -> (i32, i32) {
    %c0_i32 = arith.constant 0 : i32
    %c0_i32_0 = arith.constant 0 : i32
    %c0_i32_1 = arith.constant 0 : i32
    return %c0_i32, %c0_i32_0 : i32, i32
  }
  func.func @transform_7(%arg0: i32, %arg1: i32) -> (i32, i32) {
    %c0_i32 = arith.constant 0 : i32
    %c0_i32_0 = arith.constant 0 : i32
    %c0_i32_1 = arith.constant 0 : i32
    return %c0_i32, %c0_i32_0 : i32, i32
  }
  func.func @transform_8(%arg0: i32, %arg1: i32) -> (i32, i32) {
    %c0_i32 = arith.constant 0 : i32
    %c0_i32_0 = arith.constant 0 : i32
    %c0_i32_1 = arith.constant 0 : i32
    return %c0_i32, %c0_i32_0 : i32, i32
  }
  func.func @transform_9(%arg0: i32, %arg1: i32) -> (i32, i32) {
    %c0_i32 = arith.constant 0 : i32
    %c0_i32_0 = arith.constant 0 : i32
    %c0_i32_1 = arith.constant 0 : i32
    return %c0_i32, %c0_i32_0 : i32, i32
  }
  func.func @transform_10(%arg0: i32, %arg1: i32) -> (i32, i32) {
    %c0_i32 = arith.constant 0 : i32
    %c0_i32_0 = arith.constant 0 : i32
    %c0_i32_1 = arith.constant 0 : i32
    return %c0_i32, %c0_i32_0 : i32, i32
  }
  func.func @transform_11(%arg0: i32, %arg1: i32) -> (i32, i32) {
    %c0_i32 = arith.constant 0 : i32
    %c0_i32_0 = arith.constant 0 : i32
    %c0_i32_1 = arith.constant 0 : i32
    return %c0_i32, %c0_i32_0 : i32, i32
  }
  func.func @transform_12(%arg0: i32, %arg1: i32) -> (i32, i32) {
    %c0_i32 = arith.constant 0 : i32
    %c0_i32_0 = arith.constant 0 : i32
    %c0_i32_1 = arith.constant 0 : i32
    return %c0_i32, %c0_i32_0 : i32, i32
  }
  func.func @transform_13(%arg0: i32, %arg1: i32) -> (i32, i32) {
    %c0_i32 = arith.constant 0 : i32
    %c0_i32_0 = arith.constant 0 : i32
    %c0_i32_1 = arith.constant 0 : i32
    return %c0_i32, %c0_i32_0 : i32, i32
  }
  func.func @transform_14(%arg0: i32, %arg1: i32) -> (i32, i32) {
    %c0_i32 = arith.constant 0 : i32
    %c0_i32_0 = arith.constant 0 : i32
    %c0_i32_1 = arith.constant 0 : i32
    return %c0_i32, %c0_i32_0 : i32, i32
  }
  func.func @transform_15(%arg0: i32, %arg1: i32) -> (i32, i32) {
    %c0_i32 = arith.constant 0 : i32
    %c0_i32_0 = arith.constant 0 : i32
    %c0_i32_1 = arith.constant 0 : i32
    return %c0_i32, %c0_i32_0 : i32, i32
  }
  func.func @transform_16(%arg0: i32, %arg1: i32) -> (i32, i32, i32) {
    %c0_i32 = arith.constant 0 : i32
    %c0_i32_0 = arith.constant 0 : i32
    return %arg0, %arg1, %c0_i32 : i32, i32, i32
  }
}

</mosaic_0001>

<llo_original>
// kernel: tpu_custom_call.1
$region0: #{tpu_custom_call.1}
  #allocation0 [shape = 'u32[]', space=smem, size = 0x4, offset = 0x4, fixed_abs, tag = 'smem constant byte address 0x4 - core index']
  #allocation1 [shape = 'u32[144,128]{1,0:T(1,128)}', space=vmem, size = 0x12000, scoped, tag = 'internal scratch']
  %s0 = inlined_call_operand.vmem [shape: f32[2,8,32], index: 0, kind: input, shape index: {}]
  %s1 = inlined_call_operand.vmem [shape: bf16[2,4,8,8], index: 1, kind: input, shape index: {}]
  %s2 = inlined_call_operand.vmem [shape: bf16[2,4,8,8], index: 2, kind: input, shape index: {}]
  %s3 = inlined_call_operand.hbm [shape: bf16[2,8,8], index: 3, kind: input, shape index: {}]
  %s4 = inlined_call_operand.hbm [shape: bf16[32,32], index: 4, kind: input, shape index: {}]
  %s5 = inlined_call_operand.vmem [shape: f32[1,32], index: 5, kind: input, shape index: {}]
  %s6 = inlined_call_operand.vmem [shape: bf16[32,32], index: 6, kind: input, shape index: {}]
  %s7 = inlined_call_operand.vmem [shape: f32[1,32], index: 7, kind: input, shape index: {}]
  %s8 = inlined_call_operand.hbm [shape: f32[1,32], index: 8, kind: input, shape index: {}]
  %s9 = inlined_call_operand.hbm [shape: f32[1,32], index: 9, kind: input, shape index: {}]
  %s10 = inlined_call_operand.vmem [shape: bf16[32,128], index: 10, kind: input, shape index: {}]
  %s11 = inlined_call_operand.vmem [shape: f32[1,128], index: 11, kind: input, shape index: {}]
  %s12 = inlined_call_operand.vmem [shape: bf16[128,32], index: 12, kind: input, shape index: {}]
  %s13 = inlined_call_operand.vmem [shape: f32[1,32], index: 13, kind: input, shape index: {}]
  %s14 = inlined_call_operand.vmem [shape: f32[1,32], index: 14, kind: input, shape index: {}]
  %s15 = inlined_call_operand.vmem [shape: f32[1,32], index: 15, kind: input, shape index: {}]
  %s16 = inlined_call_operand.hbm [shape: f32[2,8,32], index: 16, kind: output, shape index: {}]
  %s17 = sld [smem:[#allocation0]]
  $region113: #{tpu_custom_call.1} parent=0
    _
  %s19 = ssub.s32 1, %s17
  %s20 = scalar_select 0, %s19, %s17
  $region1: #{tpu_custom_call.1} parent=0
    #allocation2 [shape = 'u8[4096]{0}', space=vmem, size = 0x1000, scoped, tag = 'input window, operand 3']
    #allocation3 [shape = 's32[2]{0}', space=sflag, size = 0x8, scoped, tag = 'scoped memory for tpu_custom_call.1']
    #allocation4 [shape = 's32[2]{0}', space=sflag, size = 0x8, scoped, tag = 'scoped memory for tpu_custom_call.1']
    #allocation5 [shape = 'u8[8192]{0}', space=vmem, size = 0x2000, scoped, tag = 'input window, operand 4, single buffered']
    #allocation6 [shape = 's32[1]{0}', space=sflag, size = 0x4, scoped, tag = 'scoped memory for tpu_custom_call.1']
    #allocation7 [shape = 'u8[512]{0}', space=vmem, size = 0x400, scoped, tag = 'input window, operand 8, single buffered']
    #allocation8 [shape = 'u8[512]{0}', space=vmem, size = 0x400, scoped, tag = 'input window, operand 9, single buffered']
    #allocation9 [shape = 's32[1]{0}', space=sflag, size = 0x4, scoped, tag = 'scoped memory for tpu_custom_call.1']
    #allocation10 [shape = 'u8[8192]{0}', space=vmem, size = 0x2000, scoped, tag = 'output window, operand 0']
    %21 = vsyncpa [#allocation3], 0
    %s22 = scalar_lea.sflag [#allocation3], 1
    %23 = vsyncpa %s22, 0
    %24 = vsyncpa [#allocation6], 0
    %25 = vsyncpa [#allocation9], 0
    %26 = vsyncpa [#allocation4], 0
    %s27 = scalar_lea.sflag [#allocation4], 1
    %28 = vsyncpa %s27, 0
    loop: start=0, step=1, limit=4
    $region2: #{tpu_custom_call.1} parent=1 // loop_pre_header
      _
    $region3: #{tpu_custom_call.1} parent=1 // loop_header
      %s30 = sphi 0, %s34
      %p31 = scmp.ge.s32.totalorder %s30, 4
      %s37 = sphi 0, %s49
      %s38 = sphi 0, %s45
      %s39 = sphi 0, %s37
      %s40 = sphi 0, %s38
      %s41 = sphi 0, %s39
      %s42 = sphi 0, %s40
      %s54 = sphi 0, %s56
      %s57 = sphi 0, %s54
      %s58 = sphi 0, %s57
      %s74 = sphi 0, %s58
      %s80 = sphi 0, %s82
      %s83 = sphi 0, %s80
      %s84 = sphi 0, %s83
      %s100 = sphi 0, %s84
      %s106 = sphi 0, %s108
      %s109 = sphi 0, %s106
      %s110 = sphi 0, %s109
      %s126 = sphi 0, %s110
      %s134 = sphi 0, %s136
      %s137 = sphi 0, %s134
      %s138 = sphi 0, %s137
      %s154 = sphi 0, %s138
      %s158 = sphi 0, %s158
      %s160 = sphi 0, %s158
      %s161 = sphi 0, %s160
      %s175 = sphi 0, %s161
      %s179 = sphi 0, %s179
      %s181 = sphi 0, %s179
      %s182 = sphi 0, %s181
      %s196 = sphi 0, %s182
      %s200 = sphi 0, %s200
      %s202 = sphi 0, %s200
      %s203 = sphi 0, %s202
      %s217 = sphi 0, %s203
      %s221 = sphi 0, %s221
      %s223 = sphi 0, %s221
      %s224 = sphi 0, %s223
      %s238 = sphi 0, %s224
      %s242 = sphi 0, %s242
      %s244 = sphi 0, %s242
      %s245 = sphi 0, %s244
      %s259 = sphi 0, %s245
      %s263 = sphi 0, %s263
      %s265 = sphi 0, %s263
      %s266 = sphi 0, %s265
      %s280 = sphi 0, %s266
      %s284 = sphi 0, %s284
      %s286 = sphi 0, %s284
      %s287 = sphi 0, %s286
      %s301 = sphi 0, %s287
      %s305 = sphi 0, %s305
      %s307 = sphi 0, %s305
      %s308 = sphi 0, %s307
      %s322 = sphi 0, %s308
      %s326 = sphi 0, %s326
      %s328 = sphi 0, %s326
      %s329 = sphi 0, %s328
      %s343 = sphi 0, %s329
      %s347 = sphi 0, %s347
      %s349 = sphi 0, %s347
      %s350 = sphi 0, %s349
      %s364 = sphi 0, %s350
      %s368 = sphi 0, %s368
      %s370 = sphi 0, %s368
      %s371 = sphi 0, %s370
      %s385 = sphi 0, %s371
      %s389 = sphi 0, %s389
      %s391 = sphi 0, %s389
      %s392 = sphi 0, %s391
      %s406 = sphi 0, %s392
      %s414 = sphi 0, %s416
      %s417 = sphi 0, %s414
      %s418 = sphi 0, %s417
      %s434 = sphi 0, %s418
    $region4: #{tpu_custom_call.1} parent=1 // loop_header_branch
      %33 = sbr.rel (%p31) target = $region8
    $region5: #{tpu_custom_call.1} parent=1 // loop_body
      %s35 = ssub.s32 %s30, 1
      %s36 = ssub.s32 %s30, 2
      %s43 = sadd.s32 1, %s38
      %p44 = scmp.ge.s32.totalorder %s43, 1
      %s45 = scalar_select %p44, 0, %s43
      %s46 = sadd.s32 1, %s37
      %s47 = scalar_select %p44, %s46, %s37
      %p48 = scmp.ge.s32.totalorder %s47, 2
      %s49 = scalar_select %p48, 0, %s47
      %s50 = ssub.s32 %s37, %s49
      %s51 = ssub.s32 %s38, %s45
      %s52 = sor.u32 %s50, %s51
      %p53 = scmp.eq.s32.totalorder %s52, 0
      %s55 = sadd.s32 %s54, 1
      %s56 = scalar_select %p53, %s54, %s55
      %p59 = pneg %p53
      %p60 = scmp.eq.s32.totalorder %s30, 1
      %p61 = por %p59, %p60
      %p62 = scmp.ne.s32.totalorder %s54, %s57
      %p63 = scmp.eq.s32.totalorder %s30, 0
      %p64 = por %p62, %p63
      %p65 = scmp.ne.s32.totalorder %s54, %s57
      %p66 = scmp.eq.s32.totalorder %s35, 1
      %p67 = por %p65, %p66
      %p68 = scmp.ne.s32.totalorder %s57, %s58
      %p69 = scmp.eq.s32.totalorder %s35, 0
      %p70 = por %p68, %p69
      %p71 = scmp.ne.s32.totalorder %s57, %s58
      %p72 = scmp.eq.s32.totalorder %s36, 1
      %p73 = por %p71, %p72
      %p75 = scmp.ne.s32.totalorder %s58, %s74
      %p76 = scmp.eq.s32.totalorder %s36, 0
      %p77 = por %p75, %p76
      %s78 = ssub.s32 %s37, %s49
      %p79 = scmp.eq.s32.totalorder %s78, 0
      %s81 = sadd.s32 %s80, 1
      %s82 = scalar_select %p79, %s80, %s81
      %p85 = pneg %p79
      %p86 = scmp.eq.s32.totalorder %s30, 1
      %p87 = por %p85, %p86
      %p88 = scmp.ne.s32.totalorder %s80, %s83
      %p89 = scmp.eq.s32.totalorder %s30, 0
      %p90 = por %p88, %p89
      %p91 = scmp.ne.s32.totalorder %s80, %s83
      %p92 = scmp.eq.s32.totalorder %s35, 1
      %p93 = por %p91, %p92
      %p94 = scmp.ne.s32.totalorder %s83, %s84
      %p95 = scmp.eq.s32.totalorder %s35, 0
      %p96 = por %p94, %p95
      %p97 = scmp.ne.s32.totalorder %s83, %s84
      %p98 = scmp.eq.s32.totalorder %s36, 1
      %p99 = por %p97, %p98
      %p101 = scmp.ne.s32.totalorder %s84, %s100
      %p102 = scmp.eq.s32.totalorder %s36, 0
      %p103 = por %p101, %p102
      %s104 = ssub.s32 %s37, %s49
      %p105 = scmp.eq.s32.totalorder %s104, 0
      %s107 = sadd.s32 %s106, 1
      %s108 = scalar_select %p105, %s106, %s107
      %p111 = pneg %p105
      %p112 = scmp.eq.s32.totalorder %s30, 1
      %p113 = por %p111, %p112
      %p114 = scmp.ne.s32.totalorder %s106, %s109
      %p115 = scmp.eq.s32.totalorder %s30, 0
      %p116 = por %p114, %p115
      %p117 = scmp.ne.s32.totalorder %s106, %s109
      %p118 = scmp.eq.s32.totalorder %s35, 1
      %p119 = por %p117, %p118
      %p120 = scmp.ne.s32.totalorder %s109, %s110
      %p121 = scmp.eq.s32.totalorder %s35, 0
      %p122 = por %p120, %p121
      %p123 = scmp.ne.s32.totalorder %s109, %s110
      %p124 = scmp.eq.s32.totalorder %s36, 1
      %p125 = por %p123, %p124
      %p127 = scmp.ne.s32.totalorder %s110, %s126
      %p128 = scmp.eq.s32.totalorder %s36, 0
      %p129 = por %p127, %p128
      %s130 = ssub.s32 %s37, %s49
      %s131 = ssub.s32 %s38, %s45
      %s132 = sor.u32 %s130, %s131
      %p133 = scmp.eq.s32.totalorder %s132, 0
      %s135 = sadd.s32 %s134, 1
      %s136 = scalar_select %p133, %s134, %s135
      %p139 = pneg %p133
      %p140 = scmp.eq.s32.totalorder %s30, 1
      %p141 = por %p139, %p140
      %p142 = scmp.ne.s32.totalorder %s134, %s137
      %p143 = scmp.eq.s32.totalorder %s30, 0
      %p144 = por %p142, %p143
      %p145 = scmp.ne.s32.totalorder %s134, %s137
      %p146 = scmp.eq.s32.totalorder %s35, 1
      %p147 = por %p145, %p146
      %p148 = scmp.ne.s32.totalorder %s137, %s138
      %p149 = scmp.eq.s32.totalorder %s35, 0
      %p150 = por %p148, %p149
      %p151 = scmp.ne.s32.totalorder %s137, %s138
      %p152 = scmp.eq.s32.totalorder %s36, 1
      %p153 = por %p151, %p152
      %p155 = scmp.ne.s32.totalorder %s138, %s154
      %p156 = scmp.eq.s32.totalorder %s36, 0
      %p157 = por %p155, %p156
      %s159 = sadd.s32 %s158, 1
      %p162 = scmp.eq.s32.totalorder %s30, 1
      %p163 = scmp.ne.s32.totalorder %s158, %s160
      %p164 = scmp.eq.s32.totalorder %s30, 0
      %p165 = por %p163, %p164
      %p166 = scmp.ne.s32.totalorder %s158, %s160
      %p167 = scmp.eq.s32.totalorder %s35, 1
      %p168 = por %p166, %p167
      %p169 = scmp.ne.s32.totalorder %s160, %s161
      %p170 = scmp.eq.s32.totalorder %s35, 0
      %p171 = por %p169, %p170
      %p172 = scmp.ne.s32.totalorder %s160, %s161
      %p173 = scmp.eq.s32.totalorder %s36, 1
      %p174 = por %p172, %p173
      %p176 = scmp.ne.s32.totalorder %s161, %s175
      %p177 = scmp.eq.s32.totalorder %s36, 0
      %p178 = por %p176, %p177
      %s180 = sadd.s32 %s179, 1
      %p183 = scmp.eq.s32.totalorder %s30, 1
      %p184 = scmp.ne.s32.totalorder %s179, %s181
      %p185 = scmp.eq.s32.totalorder %s30, 0
      %p186 = por %p184, %p185
      %p187 = scmp.ne.s32.totalorder %s179, %s181
      %p188 = scmp.eq.s32.totalorder %s35, 1
      %p189 = por %p187, %p188
      %p190 = scmp.ne.s32.totalorder %s181, %s182
      %p191 = scmp.eq.s32.totalorder %s35, 0
      %p192 = por %p190, %p191
      %p193 = scmp.ne.s32.totalorder %s181, %s182
      %p194 = scmp.eq.s32.totalorder %s36, 1
      %p195 = por %p193, %p194
      %p197 = scmp.ne.s32.totalorder %s182, %s196
      %p198 = scmp.eq.s32.totalorder %s36, 0
      %p199 = por %p197, %p198
      %s201 = sadd.s32 %s200, 1
      %p204 = scmp.eq.s32.totalorder %s30, 1
      %p205 = scmp.ne.s32.totalorder %s200, %s202
      %p206 = scmp.eq.s32.totalorder %s30, 0
      %p207 = por %p205, %p206
      %p208 = scmp.ne.s32.totalorder %s200, %s202
      %p209 = scmp.eq.s32.totalorder %s35, 1
      %p210 = por %p208, %p209
      %p211 = scmp.ne.s32.totalorder %s202, %s203
      %p212 = scmp.eq.s32.totalorder %s35, 0
      %p213 = por %p211, %p212
      %p214 = scmp.ne.s32.totalorder %s202, %s203
      %p215 = scmp.eq.s32.totalorder %s36, 1
      %p216 = por %p214, %p215
      %p218 = scmp.ne.s32.totalorder %s203, %s217
      %p219 = scmp.eq.s32.totalorder %s36, 0
      %p220 = por %p218, %p219
      %s222 = sadd.s32 %s221, 1
      %p225 = scmp.eq.s32.totalorder %s30, 1
      %p226 = scmp.ne.s32.totalorder %s221, %s223
      %p227 = scmp.eq.s32.totalorder %s30, 0
      %p228 = por %p226, %p227
      %p229 = scmp.ne.s32.totalorder %s221, %s223
      %p230 = scmp.eq.s32.totalorder %s35, 1
      %p231 = por %p229, %p230
      %p232 = scmp.ne.s32.totalorder %s223, %s224
      %p233 = scmp.eq.s32.totalorder %s35, 0
      %p234 = por %p232, %p233
      %p235 = scmp.ne.s32.totalorder %s223, %s224
      %p236 = scmp.eq.s32.totalorder %s36, 1
      %p237 = por %p235, %p236
      %p239 = scmp.ne.s32.totalorder %s224, %s238
      %p240 = scmp.eq.s32.totalorder %s36, 0
      %p241 = por %p239, %p240
      %s243 = sadd.s32 %s242, 1
      %p246 = scmp.eq.s32.totalorder %s30, 1
      %p247 = scmp.ne.s32.totalorder %s242, %s244
      %p248 = scmp.eq.s32.totalorder %s30, 0
      %p249 = por %p247, %p248
      %p250 = scmp.ne.s32.totalorder %s242, %s244
      %p251 = scmp.eq.s32.totalorder %s35, 1
      %p252 = por %p250, %p251
      %p253 = scmp.ne.s32.totalorder %s244, %s245
      %p254 = scmp.eq.s32.totalorder %s35, 0
      %p255 = por %p253, %p254
      %p256 = scmp.ne.s32.totalorder %s244, %s245
      %p257 = scmp.eq.s32.totalorder %s36, 1
      %p258 = por %p256, %p257
      %p260 = scmp.ne.s32.totalorder %s245, %s259
      %p261 = scmp.eq.s32.totalorder %s36, 0
      %p262 = por %p260, %p261
      %s264 = sadd.s32 %s263, 1
      %p267 = scmp.eq.s32.totalorder %s30, 1
      %p268 = scmp.ne.s32.totalorder %s263, %s265
      %p269 = scmp.eq.s32.totalorder %s30, 0
      %p270 = por %p268, %p269
      %p271 = scmp.ne.s32.totalorder %s263, %s265
      %p272 = scmp.eq.s32.totalorder %s35, 1
      %p273 = por %p271, %p272
      %p274 = scmp.ne.s32.totalorder %s265, %s266
      %p275 = scmp.eq.s32.totalorder %s35, 0
      %p276 = por %p274, %p275
      %p277 = scmp.ne.s32.totalorder %s265, %s266
      %p278 = scmp.eq.s32.totalorder %s36, 1
      %p279 = por %p277, %p278
      %p281 = scmp.ne.s32.totalorder %s266, %s280
      %p282 = scmp.eq.s32.totalorder %s36, 0
      %p283 = por %p281, %p282
      %s285 = sadd.s32 %s284, 1
      %p288 = scmp.eq.s32.totalorder %s30, 1
      %p289 = scmp.ne.s32.totalorder %s284, %s286
      %p290 = scmp.eq.s32.totalorder %s30, 0
      %p291 = por %p289, %p290
      %p292 = scmp.ne.s32.totalorder %s284, %s286
      %p293 = scmp.eq.s32.totalorder %s35, 1
      %p294 = por %p292, %p293
      %p295 = scmp.ne.s32.totalorder %s286, %s287
      %p296 = scmp.eq.s32.totalorder %s35, 0
      %p297 = por %p295, %p296
      %p298 = scmp.ne.s32.totalorder %s286, %s287
      %p299 = scmp.eq.s32.totalorder %s36, 1
      %p300 = por %p298, %p299
      %p302 = scmp.ne.s32.totalorder %s287, %s301
      %p303 = scmp.eq.s32.totalorder %s36, 0
      %p304 = por %p302, %p303
      %s306 = sadd.s32 %s305, 1
      %p309 = scmp.eq.s32.totalorder %s30, 1
      %p310 = scmp.ne.s32.totalorder %s305, %s307
      %p311 = scmp.eq.s32.totalorder %s30, 0
      %p312 = por %p310, %p311
      %p313 = scmp.ne.s32.totalorder %s305, %s307
      %p314 = scmp.eq.s32.totalorder %s35, 1
      %p315 = por %p313, %p314
      %p316 = scmp.ne.s32.totalorder %s307, %s308
      %p317 = scmp.eq.s32.totalorder %s35, 0
      %p318 = por %p316, %p317
      %p319 = scmp.ne.s32.totalorder %s307, %s308
      %p320 = scmp.eq.s32.totalorder %s36, 1
      %p321 = por %p319, %p320
      %p323 = scmp.ne.s32.totalorder %s308, %s322
      %p324 = scmp.eq.s32.totalorder %s36, 0
      %p325 = por %p323, %p324
      %s327 = sadd.s32 %s326, 1
      %p330 = scmp.eq.s32.totalorder %s30, 1
      %p331 = scmp.ne.s32.totalorder %s326, %s328
      %p332 = scmp.eq.s32.totalorder %s30, 0
      %p333 = por %p331, %p332
      %p334 = scmp.ne.s32.totalorder %s326, %s328
      %p335 = scmp.eq.s32.totalorder %s35, 1
      %p336 = por %p334, %p335
      %p337 = scmp.ne.s32.totalorder %s328, %s329
      %p338 = scmp.eq.s32.totalorder %s35, 0
      %p339 = por %p337, %p338
      %p340 = scmp.ne.s32.totalorder %s328, %s329
      %p341 = scmp.eq.s32.totalorder %s36, 1
      %p342 = por %p340, %p341
      %p344 = scmp.ne.s32.totalorder %s329, %s343
      %p345 = scmp.eq.s32.totalorder %s36, 0
      %p346 = por %p344, %p345
      %s348 = sadd.s32 %s347, 1
      %p351 = scmp.eq.s32.totalorder %s30, 1
      %p352 = scmp.ne.s32.totalorder %s347, %s349
      %p353 = scmp.eq.s32.totalorder %s30, 0
      %p354 = por %p352, %p353
      %p355 = scmp.ne.s32.totalorder %s347, %s349
      %p356 = scmp.eq.s32.totalorder %s35, 1
      %p357 = por %p355, %p356
      %p358 = scmp.ne.s32.totalorder %s349, %s350
      %p359 = scmp.eq.s32.totalorder %s35, 0
      %p360 = por %p358, %p359
      %p361 = scmp.ne.s32.totalorder %s349, %s350
      %p362 = scmp.eq.s32.totalorder %s36, 1
      %p363 = por %p361, %p362
      %p365 = scmp.ne.s32.totalorder %s350, %s364
      %p366 = scmp.eq.s32.totalorder %s36, 0
      %p367 = por %p365, %p366
      %s369 = sadd.s32 %s368, 1
      %p372 = scmp.eq.s32.totalorder %s30, 1
      %p373 = scmp.ne.s32.totalorder %s368, %s370
      %p374 = scmp.eq.s32.totalorder %s30, 0
      %p375 = por %p373, %p374
      %p376 = scmp.ne.s32.totalorder %s368, %s370
      %p377 = scmp.eq.s32.totalorder %s35, 1
      %p378 = por %p376, %p377
      %p379 = scmp.ne.s32.totalorder %s370, %s371
      %p380 = scmp.eq.s32.totalorder %s35, 0
      %p381 = por %p379, %p380
      %p382 = scmp.ne.s32.totalorder %s370, %s371
      %p383 = scmp.eq.s32.totalorder %s36, 1
      %p384 = por %p382, %p383
      %p386 = scmp.ne.s32.totalorder %s371, %s385
      %p387 = scmp.eq.s32.totalorder %s36, 0
      %p388 = por %p386, %p387
      %s390 = sadd.s32 %s389, 1
      %p393 = scmp.eq.s32.totalorder %s30, 1
      %p394 = scmp.ne.s32.totalorder %s389, %s391
      %p395 = scmp.eq.s32.totalorder %s30, 0
      %p396 = por %p394, %p395
      %p397 = scmp.ne.s32.totalorder %s389, %s391
      %p398 = scmp.eq.s32.totalorder %s35, 1
      %p399 = por %p397, %p398
      %p400 = scmp.ne.s32.totalorder %s391, %s392
      %p401 = scmp.eq.s32.totalorder %s35, 0
      %p402 = por %p400, %p401
      %p403 = scmp.ne.s32.totalorder %s391, %s392
      %p404 = scmp.eq.s32.totalorder %s36, 1
      %p405 = por %p403, %p404
      %p407 = scmp.ne.s32.totalorder %s392, %s406
      %p408 = scmp.eq.s32.totalorder %s36, 0
      %p409 = por %p407, %p408
      %s410 = ssub.s32 %s37, %s49
      %s411 = ssub.s32 %s38, %s45
      %s412 = sor.u32 %s410, %s411
      %p413 = scmp.eq.s32.totalorder %s412, 0
      %s415 = sadd.s32 %s414, 1
      %s416 = scalar_select %p413, %s414, %s415
      %p419 = pneg %p413
      %p420 = scmp.eq.s32.totalorder %s30, 1
      %p421 = por %p419, %p420
      %p422 = scmp.ne.s32.totalorder %s414, %s417
      %p423 = scmp.eq.s32.totalorder %s30, 0
      %p424 = por %p422, %p423
      %p425 = scmp.ne.s32.totalorder %s414, %s417
      %p426 = scmp.eq.s32.totalorder %s35, 1
      %p427 = por %p425, %p426
      %p428 = scmp.ne.s32.totalorder %s417, %s418
      %p429 = scmp.eq.s32.totalorder %s35, 0
      %p430 = por %p428, %p429
      %p431 = scmp.ne.s32.totalorder %s417, %s418
      %p432 = scmp.eq.s32.totalorder %s36, 1
      %p433 = por %p431, %p432
      %p435 = scmp.ne.s32.totalorder %s418, %s434
      %p436 = scmp.eq.s32.totalorder %s36, 0
      %p437 = por %p435, %p436
      %p438 = scmp.le.s32.totalorder 1, %s30
      %p439 = scmp.lt.s32.totalorder %s30, 3
      %p440 = pnand %p438, %p439
      %p441 = pneg %p440
      // Predicated region
      $region9: #{tpu_custom_call.1} parent=5 // pred_check
        _
      $region10: #{tpu_custom_call.1} parent=5 // pred_check_branch
        %443 = sbr.rel (%p440) target = $region12
      $region11: #{tpu_custom_call.1} parent=5 // pred_region
        %s444 = ssub.s32 %s30, 1
        // Predicated region
        $region13: #{tpu_custom_call.1} parent=11 // pred_check
          %p445 = pneg %p171
        $region14: #{tpu_custom_call.1} parent=11 // pred_check_branch
          %447 = sbr.rel (%p445) target = $region16
        $region15: #{tpu_custom_call.1} parent=11 // pred_region
          %s449 = ssub.s32 256, 256
          %450 = vsyncadd [#allocation6], %s449
          %s451 = sshll.u32 [#allocation5], 4
          %s452 = int_to_ptr.vmem [resolvable:$true] %s451
          %457 = dma.hbm_to_vmem [thread:$0]  %s4, 256, %s452, [#allocation6], 64, 64, 4
        $region16: #{tpu_custom_call.1} parent=11 // pred_fallthru
          _
        // Predicated region
        $region17: #{tpu_custom_call.1} parent=11 // pred_check
          %p458 = pneg %p192
        $region18: #{tpu_custom_call.1} parent=11 // pred_check_branch
          %460 = sbr.rel (%p458) target = $region20
        $region19: #{tpu_custom_call.1} parent=11 // pred_region
          _
        $region20: #{tpu_custom_call.1} parent=11 // pred_fallthru
          _
        // Predicated region
        $region21: #{tpu_custom_call.1} parent=11 // pred_check
          %p461 = pneg %p213
        $region22: #{tpu_custom_call.1} parent=11 // pred_check_branch
          %463 = sbr.rel (%p461) target = $region24
        $region23: #{tpu_custom_call.1} parent=11 // pred_region
          _
        $region24: #{tpu_custom_call.1} parent=11 // pred_fallthru
          _
        // Predicated region
        $region25: #{tpu_custom_call.1} parent=11 // pred_check
          %p464 = pneg %p234
        $region26: #{tpu_custom_call.1} parent=11 // pred_check_branch
          %466 = sbr.rel (%p464) target = $region28
        $region27: #{tpu_custom_call.1} parent=11 // pred_region
          _
        $region28: #{tpu_custom_call.1} parent=11 // pred_fallthru
          _
        // Predicated region
        $region29: #{tpu_custom_call.1} parent=11 // pred_check
          %p467 = pneg %p255
        $region30: #{tpu_custom_call.1} parent=11 // pred_check_branch
          %469 = sbr.rel (%p467) target = $region32
        $region31: #{tpu_custom_call.1} parent=11 // pred_region
          %s471 = ssub.s32 16, 16
          %472 = vsyncadd [#allocation6], %s471
          %s474 = sshll.u32 [#allocation7], 4
          %s475 = int_to_ptr.vmem [resolvable:$true] %s474
          %477 = dma.hbm_to_vmem [thread:$0]  %s8, 16, %s475, [#allocation6]
        $region32: #{tpu_custom_call.1} parent=11 // pred_fallthru
          _
        // Predicated region
        $region33: #{tpu_custom_call.1} parent=11 // pred_check
          %p478 = pneg %p276
        $region34: #{tpu_custom_call.1} parent=11 // pred_check_branch
          %480 = sbr.rel (%p478) target = $region36
        $region35: #{tpu_custom_call.1} parent=11 // pred_region
          %s482 = ssub.s32 16, 16
          %483 = vsyncadd [#allocation9], %s482
          %s485 = sshll.u32 [#allocation8], 4
          %s486 = int_to_ptr.vmem [resolvable:$true] %s485
          %488 = dma.hbm_to_vmem [thread:$0]  %s9, 16, %s486, [#allocation9]
        $region36: #{tpu_custom_call.1} parent=11 // pred_fallthru
          _
        // Predicated region
        $region37: #{tpu_custom_call.1} parent=11 // pred_check
          %p489 = pneg %p297
        $region38: #{tpu_custom_call.1} parent=11 // pred_check_branch
          %491 = sbr.rel (%p489) target = $region40
        $region39: #{tpu_custom_call.1} parent=11 // pred_region
          _
        $region40: #{tpu_custom_call.1} parent=11 // pred_fallthru
          _
        // Predicated region
        $region41: #{tpu_custom_call.1} parent=11 // pred_check
          %p492 = pneg %p318
        $region42: #{tpu_custom_call.1} parent=11 // pred_check_branch
          %494 = sbr.rel (%p492) target = $region44
        $region43: #{tpu_custom_call.1} parent=11 // pred_region
          _
        $region44: #{tpu_custom_call.1} parent=11 // pred_fallthru
          _
        // Predicated region
        $region45: #{tpu_custom_call.1} parent=11 // pred_check
          %p495 = pneg %p339
        $region46: #{tpu_custom_call.1} parent=11 // pred_check_branch
          %497 = sbr.rel (%p495) target = $region48
        $region47: #{tpu_custom_call.1} parent=11 // pred_region
          _
        $region48: #{tpu_custom_call.1} parent=11 // pred_fallthru
          _
        // Predicated region
        $region49: #{tpu_custom_call.1} parent=11 // pred_check
          %p498 = pneg %p360
        $region50: #{tpu_custom_call.1} parent=11 // pred_check_branch
          %500 = sbr.rel (%p498) target = $region52
        $region51: #{tpu_custom_call.1} parent=11 // pred_region
          _
        $region52: #{tpu_custom_call.1} parent=11 // pred_fallthru
          _
        // Predicated region
        $region53: #{tpu_custom_call.1} parent=11 // pred_check
          %p501 = pneg %p381
        $region54: #{tpu_custom_call.1} parent=11 // pred_check_branch
          %503 = sbr.rel (%p501) target = $region56
        $region55: #{tpu_custom_call.1} parent=11 // pred_region
          _
        $region56: #{tpu_custom_call.1} parent=11 // pred_fallthru
          _
        // Predicated region
        $region57: #{tpu_custom_call.1} parent=11 // pred_check
          %p504 = pneg %p402
        $region58: #{tpu_custom_call.1} parent=11 // pred_check_branch
          %506 = sbr.rel (%p504) target = $region60
        $region59: #{tpu_custom_call.1} parent=11 // pred_region
          _
        $region60: #{tpu_custom_call.1} parent=11 // pred_fallthru
          _
      $region12: #{tpu_custom_call.1} parent=5 // pred_fallthru
        _
      %p507 = scmp.lt.s32.totalorder %s30, 2
      // Predicated region
      $region61: #{tpu_custom_call.1} parent=5 // pred_check
        %p508 = pneg %p507
      $region62: #{tpu_custom_call.1} parent=5 // pred_check_branch
        %510 = sbr.rel (%p508) target = $region64
      $region63: #{tpu_custom_call.1} parent=5 // pred_region
        // Predicated region
        $region65: #{tpu_custom_call.1} parent=63 // pred_check
          %p511 = pneg %p64
        $region66: #{tpu_custom_call.1} parent=63 // pred_check_branch
          %513 = sbr.rel (%p511) target = $region68
        $region67: #{tpu_custom_call.1} parent=63 // pred_region
          %p514 = scmp.lt.s32.totalorder %s37, 1
          %s515 = scalar_select %p514, %s37, 1
          %p516 = scmp.lt.s32.totalorder %s38, 0
          %s517 = scalar_select %p516, %s38, 0
          %s518 = sadd.s32 %s517, %s515
          %s519 = smul.addr %s518, 8
          %s520 = scalar_lea.vmem %s0, %s519
        $region68: #{tpu_custom_call.1} parent=63 // pred_fallthru
          _
        // Predicated region
        $region69: #{tpu_custom_call.1} parent=63 // pred_check
          %p521 = pneg %p90
        $region70: #{tpu_custom_call.1} parent=63 // pred_check_branch
          %523 = sbr.rel (%p521) target = $region72
        $region71: #{tpu_custom_call.1} parent=63 // pred_region
          %p524 = scmp.lt.s32.totalorder %s37, 1
          %s525 = scalar_select %p524, %s37, 1
          %s526 = smul.addr %s525, 4
          %s527 = smul.addr %s526, 4
          %s528 = scalar_lea.vmem %s1, %s527
        $region72: #{tpu_custom_call.1} parent=63 // pred_fallthru
          _
        // Predicated region
        $region73: #{tpu_custom_call.1} parent=63 // pred_check
          %p529 = pneg %p116
        $region74: #{tpu_custom_call.1} parent=63 // pred_check_branch
          %531 = sbr.rel (%p529) target = $region76
        $region75: #{tpu_custom_call.1} parent=63 // pred_region
          %p532 = scmp.lt.s32.totalorder %s37, 1
          %s533 = scalar_select %p532, %s37, 1
          %s534 = smul.addr %s533, 4
          %s535 = smul.addr %s534, 4
          %s536 = scalar_lea.vmem %s2, %s535
        $region76: #{tpu_custom_call.1} parent=63 // pred_fallthru
          _
        // Predicated region
        $region77: #{tpu_custom_call.1} parent=63 // pred_check
          %p537 = pneg %p144
        $region78: #{tpu_custom_call.1} parent=63 // pred_check_branch
          %539 = sbr.rel (%p537) target = $region80
        $region79: #{tpu_custom_call.1} parent=63 // pred_region
          %s540 = sand.u32 %s134, 1
          %s541 = scalar_lea.sflag [#allocation3], %s540
          %s542 = sand.u32 %s134, 1
          %s543 = smul.addr %s542, 4
          %s544 = scalar_lea.vmem [#allocation2], %s543
          %s546 = ssub.s32 64, 64
          %547 = vsyncadd %s541, %s546
          %s548 = sadd.s32 %s38, %s37
          %s549 = smul.addr %s548, 64
          %s550 = scalar_lea.hbm %s3, %s549
          %s552 = sshll.u32 %s544, 4
          %s553 = int_to_ptr.vmem [resolvable:$true] %s552
          %555 = dma.hbm_to_vmem [thread:$0]  %s550, 64, %s553, %s541
        $region80: #{tpu_custom_call.1} parent=63 // pred_fallthru
          _
      $region64: #{tpu_custom_call.1} parent=5 // pred_fallthru
        _
      %p556 = scmp.le.s32.totalorder 1, %s30
      %p557 = scmp.lt.s32.totalorder %s30, 3
      %p558 = pnand %p556, %p557
      %p559 = pneg %p558
      // Predicated region
      $region81: #{tpu_custom_call.1} parent=5 // pred_check
        _
      $region82: #{tpu_custom_call.1} parent=5 // pred_check_branch
        %561 = sbr.rel (%p558) target = $region84
      $region83: #{tpu_custom_call.1} parent=5 // pred_region
        %s562 = ssub.s32 %s30, 1
        %s563 = sand.u32 %s137, 1
        %s564 = scalar_lea.sflag [#allocation3], %s563
        %s565 = sand.u32 %s137, 1
        %s566 = smul.addr %s565, 4
        %s567 = scalar_lea.vmem [#allocation2], %s566
        // Predicated region
        $region85: #{tpu_custom_call.1} parent=83 // pred_check
          %p568 = pneg %p150
        $region86: #{tpu_custom_call.1} parent=83 // pred_check_branch
          %570 = sbr.rel (%p568) target = $region88
        $region87: #{tpu_custom_call.1} parent=83 // pred_region
          %571 = dma.done %s564, 64
        $region88: #{tpu_custom_call.1} parent=83 // pred_fallthru
          _
        // Predicated region
        $region89: #{tpu_custom_call.1} parent=83 // pred_check
          %p572 = pneg %p171
        $region90: #{tpu_custom_call.1} parent=83 // pred_check_branch
          %574 = sbr.rel (%p572) target = $region92
        $region91: #{tpu_custom_call.1} parent=83 // pred_region
          %575 = dma.done [#allocation6], 256
        $region92: #{tpu_custom_call.1} parent=83 // pred_fallthru
          _
        // Predicated region
        $region93: #{tpu_custom_call.1} parent=83 // pred_check
          %p576 = pneg %p255
        $region94: #{tpu_custom_call.1} parent=83 // pred_check_branch
          %578 = sbr.rel (%p576) target = $region96
        $region95: #{tpu_custom_call.1} parent=83 // pred_region
          %579 = dma.done [#allocation6], 16
        $region96: #{tpu_custom_call.1} parent=83 // pred_fallthru
          _
        // Predicated region
        $region97: #{tpu_custom_call.1} parent=83 // pred_check
          %p580 = pneg %p276
        $region98: #{tpu_custom_call.1} parent=83 // pred_check_branch
          %582 = sbr.rel (%p580) target = $region100
        $region99: #{tpu_custom_call.1} parent=83 // pred_region
          %583 = dma.done [#allocation9], 16
        $region100: #{tpu_custom_call.1} parent=83 // pred_fallthru
          _
        %p584 = scmp.lt.s32.totalorder %s39, 1
        %s585 = scalar_select %p584, %s39, 1
        %p586 = scmp.lt.s32.totalorder %s40, 0
        %s587 = scalar_select %p586, %s40, 0
        %s588 = sadd.s32 %s587, %s585
        %s589 = smul.addr %s588, 8
        %s590 = scalar_lea.vmem %s0, %s589
        %p591 = pneg %p70
        %p592 = pneg %p67
        %p593 = scmp.lt.s32.totalorder %s39, 1
        %s594 = scalar_select %p593, %s39, 1
        %s595 = smul.addr %s594, 4
        %s596 = smul.addr %s595, 4
        %s597 = scalar_lea.vmem %s1, %s596
        %p598 = pneg %p96
        %p599 = pneg %p93
        %p600 = scmp.lt.s32.totalorder %s39, 1
        %s601 = scalar_select %p600, %s39, 1
        %s602 = smul.addr %s601, 4
        %s603 = smul.addr %s602, 4
        %s604 = scalar_lea.vmem %s2, %s603
        %p605 = pneg %p122
        %p606 = pneg %p119
        %s607 = sand.u32 %s137, 1
        %s608 = scalar_lea.sflag [#allocation3], %s607
        %s609 = sand.u32 %s137, 1
        %s610 = smul.addr %s609, 4
        %s611 = scalar_lea.vmem [#allocation2], %s610
        %p612 = pneg %p150
        %p613 = pneg %p147
        %p614 = pneg %p171
        %p615 = pneg %p168
        %p616 = pneg %p192
        %p617 = pneg %p189
        %p618 = pneg %p213
        %p619 = pneg %p210
        %p620 = pneg %p234
        %p621 = pneg %p231
        %p622 = pneg %p255
        %p623 = pneg %p252
        %p624 = pneg %p276
        %p625 = pneg %p273
        %p626 = pneg %p297
        %p627 = pneg %p294
        %p628 = pneg %p318
        %p629 = pneg %p315
        %p630 = pneg %p339
        %p631 = pneg %p336
        %p632 = pneg %p360
        %p633 = pneg %p357
        %p634 = pneg %p381
        %p635 = pneg %p378
        %p636 = pneg %p402
        %p637 = pneg %p399
        %p638 = pneg %p430
        %p639 = pneg %p427
        %s640 = sand.u32 %s417, 1
        %s641 = scalar_lea.sflag [#allocation4], %s640
        %s642 = sand.u32 %s417, 1
        %s643 = smul.addr %s642, 8
        %s644 = scalar_lea.vmem [#allocation10], %s643
        %p645 = scmp.lt.s32.totalorder %s39, 1
        %s646 = scalar_select %p645, %s39, 1
        %p647 = scmp.lt.s32.totalorder %s40, 0
        %s648 = scalar_select %p647, %s40, 0
        %s649 = sadd.s32 %s648, %s646
        %s650 = smul.addr %s649, 8
        %s651 = scalar_lea.vmem %s0, %s650
        %p652 = scmp.lt.s32.totalorder %s39, 1
        %s653 = scalar_select %p652, %s39, 1
        %s654 = smul.addr %s653, 4
        %s655 = smul.addr %s654, 4
        %s656 = scalar_lea.vmem %s1, %s655
        %p657 = scmp.lt.s32.totalorder %s39, 1
        %s658 = scalar_select %p657, %s39, 1
        %s659 = smul.addr %s658, 4
        %s660 = smul.addr %s659, 4
        %s661 = scalar_lea.vmem %s2, %s660
        %v663 = vld [vmem:[%s651] sm:$0xff]
        %v664 = vld [vmem:[%s656] sm:$0xf]
        %v665 = vld [vmem:[%s656 + $0x4] sm:$0xf]
        %v666 = vld [vmem:[%s656 + $0x8] sm:$0xf]
        %v667 = vld [vmem:[%s656 + $0xc] sm:$0xf]
        %v668 = vld [vmem:[%s661] sm:$0xf]
        %v669 = vld [vmem:[%s661 + $0x4] sm:$0xf]
        %v670 = vld [vmem:[%s661 + $0x8] sm:$0xf]
        %v671 = vld [vmem:[%s661 + $0xc] sm:$0xf]
        %v672 = vld [vmem:[%s567] sm:$0xf]
        %v673 = vunpack.c.l.bf16 %v672
        %v674 = vpack.c.bf16 %v663, %v663
        %v675 = vld [vmem:[#allocation5] sm:$0xf]
        %v676 = vld [vmem:[#allocation5 + $0x4] sm:$0xf]
        %v677 = vld [vmem:[#allocation5 + $0x8] sm:$0xf]
        %v678 = vld [vmem:[#allocation5 + $0xc] sm:$0xf]
        %v679 = vld [vmem:[%s5] sm:$0x1]
        %v681 = vlaneseq
        %v682 = vshrl.u32 %v681, 7
        %v683 = vsub.s32 0, %v682
        %v684 = vrot.slane %v679, %v683
        %v690 = vunpack.c.l.b16 %v675
        %v691 = vunpack.c.l.b16 %v676
        %v692 = vunpack.c.l.b16 %v677
        %v693 = vunpack.c.l.b16 %v678
        %v694 = vpack.c.b16 %v691, %v690
        %v695 = vpack.c.b16 %v693, %v692
        %vm698 = vcmask 261120
        %v700 = vsel %vm698, %v674, 0
        %702 = vmatprep.subr.bf16.mxu0 0
        %703 = vmatpush1.bf16.msra.mxu0 %v694
        %704 = vmatprep.subr.bf16.mxu0 0
        %705 = vmatpush1.bf16.msra.mxu0 %v695
        %706 = vmatprep.subr.bf16.mxu0 0
        %707 = vmatpush1.bf16.msra.mxu0 0
        %708 = vmatprep.subr.bf16.mxu0 0
        %709 = vmatpush1.bf16.msra.mxu0 0
        %710 = vmatprep.subr.bf16.mxu0 0
        %711 = vmatpush1.bf16.msra.mxu0 0
        %712 = vmatprep.subr.bf16.mxu0 0
        %713 = vmatpush1.bf16.msra.mxu0 0
        %714 = vmatprep.subr.bf16.mxu0 0
        %715 = vmatpush1.bf16.msra.mxu0 0
        %716 = vmatprep.subr.bf16.mxu0 0
        %717 = vmatpush1.bf16.msra.mxu0 0
        %718 = vmatprep.subr.bf16.mxu0 0
        %719 = vmatpush1.bf16.msra.mxu0 0
        %720 = vmatprep.subr.bf16.mxu0 0
        %721 = vmatpush1.bf16.msra.mxu0 0
        %722 = vmatprep.subr.bf16.mxu0 0
        %723 = vmatpush1.bf16.msra.mxu0 0
        %724 = vmatprep.subr.bf16.mxu0 0
        %725 = vmatpush1.bf16.msra.mxu0 0
        %726 = vmatprep.subr.bf16.mxu0 0
        %727 = vmatpush1.bf16.msra.mxu0 0
        %728 = vmatprep.subr.bf16.mxu0 0
        %729 = vmatpush1.bf16.msra.mxu0 0
        %730 = vmatprep.subr.bf16.mxu0 0
        %731 = vmatpush1.bf16.msra.mxu0 0
        %732 = vmatprep.subr.bf16.mxu0 0
        %733 = vmatpush1.bf16.msra.mxu0 0
        %734 = vmatprep.mubr.bf16.mxu0 0
        %735 = vmatmul.mubr.bf16.gmra.mrb[0].mxu0 %v700
        %v736 = vpop.f32.mrb[0].mxu0
        %v737 = vadd.f32 %v684, %v736
        %v738 = vpop.f32.mrb[0].mxu0
        %v739 = vpop.f32.mrb[0].mxu0
        %v740 = vpop.f32.mrb[0].mxu0
        %741 = vdwg.mxu0
        %v742 = vmul.f32 %v737, 0.35355338
        %744 = vrot.lane.b32.xlu0 %v742, 120
        %v745 = vpop.permute.xlu0 %744
        %747 = vrot.lane.b32.xlu0 %v742, 112
        %v748 = vpop.permute.xlu0 %747
        %750 = vrot.lane.b32.xlu0 %v742, 104
        %v751 = vpop.permute.xlu0 %750
        %v753 = vcombine.low %v742, %v748
        %v754 = vcombine.high %v742, %v748
        %v756 = vunpack.c.l.s4 1983009808
        %v757 = vunpack.c.0.s8 %v756
        %v758 = vlaneseq
        %v759 = vshrl.u32 %v758, 7
        %v760 = vsub.s32 %v757, %v759
        %v761 = vrot.slane %v753, %v760
        %v763 = vunpack.c.l.s4 1983009808
        %v764 = vunpack.c.0.s8 %v763
        %v765 = vlaneseq
        %v766 = vshrl.u32 %v765, 7
        %v767 = vsub.s32 %v764, %v766
        %v768 = vrot.slane %v754, %v767
        %v769 = vcombine.low %v745, %v751
        %v770 = vcombine.high %v745, %v751
        %v772 = vunpack.c.l.s4 1983009808
        %v773 = vunpack.c.0.s8 %v772
        %v774 = vlaneseq
        %v775 = vshrl.u32 %v774, 7
        %v776 = vsub.s32 %v773, %v775
        %v777 = vrot.slane %v769, %v776
        %v779 = vunpack.c.l.s4 1983009808
        %v780 = vunpack.c.0.s8 %v779
        %v781 = vlaneseq
        %v782 = vshrl.u32 %v781, 7
        %v783 = vsub.s32 %v780, %v782
        %v784 = vrot.slane %v770, %v783
        %v785 = vcombine.low %v761, %v777
        %v786 = vcombine.high %v761, %v777
        %v788 = vunpack.c.l.s4 1934713408
        %v789 = vunpack.c.0.s8 %v788
        %v790 = vlaneseq
        %v791 = vshrl.u32 %v790, 7
        %v792 = vsub.s32 %v789, %v791
        %v793 = vrot.slane %v785, %v792
        %v795 = vunpack.c.l.s4 1934713408
        %v796 = vunpack.c.0.s8 %v795
        %v797 = vlaneseq
        %v798 = vshrl.u32 %v797, 7
        %v799 = vsub.s32 %v796, %v798
        %v800 = vrot.slane %v786, %v799
        %v801 = vcombine.low %v768, %v784
        %v802 = vcombine.high %v768, %v784
        %v804 = vunpack.c.l.s4 1934713408
        %v805 = vunpack.c.0.s8 %v804
        %v806 = vlaneseq
        %v807 = vshrl.u32 %v806, 7
        %v808 = vsub.s32 %v805, %v807
        %v809 = vrot.slane %v801, %v808
        %v811 = vunpack.c.l.s4 1934713408
        %v812 = vunpack.c.0.s8 %v811
        %v813 = vlaneseq
        %v814 = vshrl.u32 %v813, 7
        %v815 = vsub.s32 %v812, %v814
        %v816 = vrot.slane %v802, %v815
        %v817 = vcombine.high %v793, 0.0
        %v818 = vcombine.high %v800, 0.0
        %v819 = vcombine.high %v809, 0.0
        %v820 = vcombine.high %v816, 0.0
        %v821 = vpack.c.bf16 %v793, %v793
        %v822 = vpack.c.bf16 %v817, %v817
        %v823 = vpack.c.bf16 %v800, %v800
        %v824 = vpack.c.bf16 %v818, %v818
        %v825 = vpack.c.bf16 %v809, %v809
        %v826 = vpack.c.bf16 %v819, %v819
        %v827 = vpack.c.bf16 %v816, %v816
        %v828 = vpack.c.bf16 %v820, %v820
        %v829 = vcombine.low %v821, %v825
        %v831 = vunpack.c.l.s4 1983009808
        %v832 = vunpack.c.0.s8 %v831
        %v833 = vlaneseq
        %v834 = vshrl.u32 %v833, 7
        %v835 = vsub.s32 %v832, %v834
        %v836 = vrot.slane %v829, %v835
        %v837 = vcombine.low %v823, %v827
        %v839 = vunpack.c.l.s4 1983009808
        %v840 = vunpack.c.0.s8 %v839
        %v841 = vlaneseq
        %v842 = vshrl.u32 %v841, 7
        %v843 = vsub.s32 %v840, %v842
        %v844 = vrot.slane %v837, %v843
        %v845 = vcombine.low %v836, %v844
        %v847 = vunpack.c.l.s4 1934713408
        %v848 = vunpack.c.0.s8 %v847
        %v849 = vlaneseq
        %v850 = vshrl.u32 %v849, 7
        %v851 = vsub.s32 %v848, %v850
        %v852 = vrot.slane %v845, %v851
        %v853 = vcombine.high %v852, 0
        %v854 = vcombine.low %v822, %v826
        %v856 = vunpack.c.l.s4 1983009808
        %v857 = vunpack.c.0.s8 %v856
        %v858 = vlaneseq
        %v859 = vshrl.u32 %v858, 7
        %v860 = vsub.s32 %v857, %v859
        %v861 = vrot.slane %v854, %v860
        %v862 = vcombine.low %v824, %v828
        %v864 = vunpack.c.l.s4 1983009808
        %v865 = vunpack.c.0.s8 %v864
        %v866 = vlaneseq
        %v867 = vshrl.u32 %v866, 7
        %v868 = vsub.s32 %v865, %v867
        %v869 = vrot.slane %v862, %v868
        %v870 = vcombine.low %v861, %v869
        %v872 = vunpack.c.l.s4 1934713408
        %v873 = vunpack.c.0.s8 %v872
        %v874 = vlaneseq
        %v875 = vshrl.u32 %v874, 7
        %v876 = vsub.s32 %v873, %v875
        %v877 = vrot.slane %v870, %v876
        %v878 = vcombine.high %v877, 0
        %v881 = vpack.i.b16 %v877, %v852
        %v882 = vshrl.u32 %v852, 16
        %v883 = vshrl.u32 %v877, 16
        %v884 = vpack.i.b16 %v883, %v882
        %v887 = vpack.i.b16 %v878, %v853
        %v888 = vshrl.u32 %v853, 16
        %v889 = vshrl.u32 %v878, 16
        %v890 = vpack.i.b16 %v889, %v888
        %vm891 = vcmask 64512
        %v893 = vsel %vm891, %v881, 0
        %v896 = vsel %vm891, %v664, 0
        %898 = vmatprep.subr.bf16.mxu0 0
        %899 = vmatpush1.bf16.xpose.msra.mxu0 %v896
        %900 = vmatprep.subr.bf16.mxu0 0
        %901 = vmatpush1.bf16.xpose.msra.mxu0 0
        %902 = vmatprep.subr.bf16.mxu0 0
        %903 = vmatpush1.bf16.xpose.msra.mxu0 0
        %904 = vmatprep.subr.bf16.mxu0 0
        %905 = vmatpush1.bf16.xpose.msra.mxu0 0
        %906 = vmatprep.subr.bf16.mxu0 0
        %907 = vmatpush1.bf16.xpose.msra.mxu0 0
        %908 = vmatprep.subr.bf16.mxu0 0
        %909 = vmatpush1.bf16.xpose.msra.mxu0 0
        %910 = vmatprep.subr.bf16.mxu0 0
        %911 = vmatpush1.bf16.xpose.msra.mxu0 0
        %912 = vmatprep.subr.bf16.mxu0 0
        %913 = vmatpush1.bf16.xpose.msra.mxu0 0
        %914 = vmatprep.subr.bf16.mxu0 0
        %915 = vmatpush1.bf16.xpose.msra.mxu0 0
        %916 = vmatprep.subr.bf16.mxu0 0
        %917 = vmatpush1.bf16.xpose.msra.mxu0 0
        %918 = vmatprep.subr.bf16.mxu0 0
        %919 = vmatpush1.bf16.xpose.msra.mxu0 0
        %920 = vmatprep.subr.bf16.mxu0 0
        %921 = vmatpush1.bf16.xpose.msra.mxu0 0
        %922 = vmatprep.subr.bf16.mxu0 0
        %923 = vmatpush1.bf16.xpose.msra.mxu0 0
        %924 = vmatprep.subr.bf16.mxu0 0
        %925 = vmatpush1.bf16.xpose.msra.mxu0 0
        %926 = vmatprep.subr.bf16.mxu0 0
        %927 = vmatpush1.bf16.xpose.msra.mxu0 0
        %928 = vmatprep.subr.bf16.mxu0 0
        %929 = vmatpush1.bf16.xpose.msra.mxu0 0
        %930 = vmatprep.mubr.bf16.mxu0 0
        %931 = vmatmul.mubr.bf16.gmra.mrb[0].mxu0 %v893
        %v932 = vpop.f32.mrb[0].mxu0
        %v933 = vadd.f32 %v673, %v932
        %v934 = vpop.f32.mrb[0].mxu0
        %v935 = vpop.f32.mrb[0].mxu0
        %v936 = vpop.f32.mrb[0].mxu0
        %937 = vdwg.mxu0
        %v939 = vsel %vm891, %v884, 0
        %v942 = vsel %vm891, %v665, 0
        %944 = vmatprep.subr.bf16.mxu0 0
        %945 = vmatpush1.bf16.xpose.msra.mxu0 %v942
        %946 = vmatprep.subr.bf16.mxu0 0
        %947 = vmatpush1.bf16.xpose.msra.mxu0 0
        %948 = vmatprep.subr.bf16.mxu0 0
        %949 = vmatpush1.bf16.xpose.msra.mxu0 0
        %950 = vmatprep.subr.bf16.mxu0 0
        %951 = vmatpush1.bf16.xpose.msra.mxu0 0
        %952 = vmatprep.subr.bf16.mxu0 0
        %953 = vmatpush1.bf16.xpose.msra.mxu0 0
        %954 = vmatprep.subr.bf16.mxu0 0
        %955 = vmatpush1.bf16.xpose.msra.mxu0 0
        %956 = vmatprep.subr.bf16.mxu0 0
        %957 = vmatpush1.bf16.xpose.msra.mxu0 0
        %958 = vmatprep.subr.bf16.mxu0 0
        %959 = vmatpush1.bf16.xpose.msra.mxu0 0
        %960 = vmatprep.subr.bf16.mxu0 0
        %961 = vmatpush1.bf16.xpose.msra.mxu0 0
        %962 = vmatprep.subr.bf16.mxu0 0
        %963 = vmatpush1.bf16.xpose.msra.mxu0 0
        %964 = vmatprep.subr.bf16.mxu0 0
        %965 = vmatpush1.bf16.xpose.msra.mxu0 0
        %966 = vmatprep.subr.bf16.mxu0 0
        %967 = vmatpush1.bf16.xpose.msra.mxu0 0
        %968 = vmatprep.subr.bf16.mxu0 0
        %969 = vmatpush1.bf16.xpose.msra.mxu0 0
        %970 = vmatprep.subr.bf16.mxu0 0
        %971 = vmatpush1.bf16.xpose.msra.mxu0 0
        %972 = vmatprep.subr.bf16.mxu0 0
        %973 = vmatpush1.bf16.xpose.msra.mxu0 0
        %974 = vmatprep.subr.bf16.mxu0 0
        %975 = vmatpush1.bf16.xpose.msra.mxu0 0
        %976 = vmatprep.mubr.bf16.mxu0 0
        %977 = vmatmul.mubr.bf16.gmra.mrb[0].mxu0 %v939
        %v978 = vpop.f32.mrb[0].mxu0
        %v979 = vadd.f32 %v673, %v978
        %v980 = vpop.f32.mrb[0].mxu0
        %v981 = vpop.f32.mrb[0].mxu0
        %v982 = vpop.f32.mrb[0].mxu0
        %983 = vdwg.mxu0
        %v985 = vsel %vm891, %v887, 0
        %v988 = vsel %vm891, %v666, 0
        %990 = vmatprep.subr.bf16.mxu0 0
        %991 = vmatpush1.bf16.xpose.msra.mxu0 %v988
        %992 = vmatprep.subr.bf16.mxu0 0
        %993 = vmatpush1.bf16.xpose.msra.mxu0 0
        %994 = vmatprep.subr.bf16.mxu0 0
        %995 = vmatpush1.bf16.xpose.msra.mxu0 0
        %996 = vmatprep.subr.bf16.mxu0 0
        %997 = vmatpush1.bf16.xpose.msra.mxu0 0
        %998 = vmatprep.subr.bf16.mxu0 0
        %999 = vmatpush1.bf16.xpose.msra.mxu0 0
        %1000 = vmatprep.subr.bf16.mxu0 0
        %1001 = vmatpush1.bf16.xpose.msra.mxu0 0
        %1002 = vmatprep.subr.bf16.mxu0 0
        %1003 = vmatpush1.bf16.xpose.msra.mxu0 0
        %1004 = vmatprep.subr.bf16.mxu0 0
        %1005 = vmatpush1.bf16.xpose.msra.mxu0 0
        %1006 = vmatprep.subr.bf16.mxu0 0
        %1007 = vmatpush1.bf16.xpose.msra.mxu0 0
        %1008 = vmatprep.subr.bf16.mxu0 0
        %1009 = vmatpush1.bf16.xpose.msra.mxu0 0
        %1010 = vmatprep.subr.bf16.mxu0 0
        %1011 = vmatpush1.bf16.xpose.msra.mxu0 0
        %1012 = vmatprep.subr.bf16.mxu0 0
        %1013 = vmatpush1.bf16.xpose.msra.mxu0 0
        %1014 = vmatprep.subr.bf16.mxu0 0
        %1015 = vmatpush1.bf16.xpose.msra.mxu0 0
        %1016 = vmatprep.subr.bf16.mxu0 0
        %1017 = vmatpush1.bf16.xpose.msra.mxu0 0
        %1018 = vmatprep.subr.bf16.mxu0 0
        %1019 = vmatpush1.bf16.xpose.msra.mxu0 0
        %1020 = vmatprep.subr.bf16.mxu0 0
        %1021 = vmatpush1.bf16.xpose.msra.mxu0 0
        %1022 = vmatprep.mubr.bf16.mxu0 0
        %1023 = vmatmul.mubr.bf16.gmra.mrb[0].mxu0 %v985
        %v1024 = vpop.f32.mrb[0].mxu0
        %v1025 = vadd.f32 %v673, %v1024
        %v1026 = vpop.f32.mrb[0].mxu0
        %v1027 = vpop.f32.mrb[0].mxu0
        %v1028 = vpop.f32.mrb[0].mxu0
        %1029 = vdwg.mxu0
        %v1031 = vsel %vm891, %v890, 0
        %v1034 = vsel %vm891, %v667, 0
        %1036 = vmatprep.subr.bf16.mxu0 0
        %1037 = vmatpush1.bf16.xpose.msra.mxu0 %v1034
        %1038 = vmatprep.subr.bf16.mxu0 0
        %1039 = vmatpush1.bf16.xpose.msra.mxu0 0
        %1040 = vmatprep.subr.bf16.mxu0 0
        %1041 = vmatpush1.bf16.xpose.msra.mxu0 0
        %1042 = vmatprep.subr.bf16.mxu0 0
        %1043 = vmatpush1.bf16.xpose.msra.mxu0 0
        %1044 = vmatprep.subr.bf16.mxu0 0
        %1045 = vmatpush1.bf16.xpose.msra.mxu0 0
        %1046 = vmatprep.subr.bf16.mxu0 0
        %1047 = vmatpush1.bf16.xpose.msra.mxu0 0
        %1048 = vmatprep.subr.bf16.mxu0 0
        %1049 = vmatpush1.bf16.xpose.msra.mxu0 0
        %1050 = vmatprep.subr.bf16.mxu0 0
        %1051 = vmatpush1.bf16.xpose.msra.mxu0 0
        %1052 = vmatprep.subr.bf16.mxu0 0
        %1053 = vmatpush1.bf16.xpose.msra.mxu0 0
        %1054 = vmatprep.subr.bf16.mxu0 0
        %1055 = vmatpush1.bf16.xpose.msra.mxu0 0
        %1056 = vmatprep.subr.bf16.mxu0 0
        %1057 = vmatpush1.bf16.xpose.msra.mxu0 0
        %1058 = vmatprep.subr.bf16.mxu0 0
        %1059 = vmatpush1.bf16.xpose.msra.mxu0 0
        %1060 = vmatprep.subr.bf16.mxu0 0
        %1061 = vmatpush1.bf16.xpose.msra.mxu0 0
        %1062 = vmatprep.subr.bf16.mxu0 0
        %1063 = vmatpush1.bf16.xpose.msra.mxu0 0
        %1064 = vmatprep.subr.bf16.mxu0 0
        %1065 = vmatpush1.bf16.xpose.msra.mxu0 0
        %1066 = vmatprep.subr.bf16.mxu0 0
        %1067 = vmatpush1.bf16.xpose.msra.mxu0 0
        %1068 = vmatprep.mubr.bf16.mxu0 0
        %1069 = vmatmul.mubr.bf16.gmra.mrb[0].mxu0 %v1031
        %v1070 = vpop.f32.mrb[0].mxu0
        %v1071 = vadd.f32 %v673, %v1070
        %v1072 = vpop.f32.mrb[0].mxu0
        %v1073 = vpop.f32.mrb[0].mxu0
        %v1074 = vpop.f32.mrb[0].mxu0
        %1075 = vdwg.mxu0
        %v1076 = vsel %vm891, %v933, -inf
        %1077 = vmax.xlane.f32.xlu0 %v1076
        %v1078 = vpop.xlane.xlu0 %1077
        %v1079 = vsel %vm891, %v979, -inf
        %1080 = vmax.xlane.f32.xlu0 %v1079
        %v1081 = vpop.xlane.xlu0 %1080
        %v1082 = vsel %vm891, %v1025, -inf
        %1083 = vmax.xlane.f32.xlu0 %v1082
        %v1084 = vpop.xlane.xlu0 %1083
        %v1085 = vsel %vm891, %v1071, -inf
        %1086 = vmax.xlane.f32.xlu0 %v1085
        %v1087 = vpop.xlane.xlu0 %1086
        %v1088 = vsub.f32 %v933, %v1078
        %v1089 = vsub.f32 %v979, %v1081
        %v1090 = vsub.f32 %v1025, %v1084
        %v1091 = vsub.f32 %v1071, %v1087
        %v1092 = vmul.f32 %v1088, 1.442695
        %v1093 = vpow.pop %v1092
        %v1094 = vmul.f32 %v1089, 1.442695
        %v1095 = vpow.pop %v1094
        %v1096 = vmul.f32 %v1090, 1.442695
        %v1097 = vpow.pop %v1096
        %v1098 = vmul.f32 %v1091, 1.442695
        %v1099 = vpow.pop %v1098
        %v1100 = vsel %vm891, %v1093, 0.0
        %1101 = vadd.xlane.f32.xlu0 %v1100
        %v1102 = vpop.xlane.xlu0 %1101
        %v1103 = vsel %vm891, %v1095, 0.0
        %1104 = vadd.xlane.f32.xlu0 %v1103
        %v1105 = vpop.xlane.xlu0 %1104
        %v1106 = vsel %vm891, %v1097, 0.0
        %1107 = vadd.xlane.f32.xlu0 %v1106
        %v1108 = vpop.xlane.xlu0 %1107
        %v1109 = vsel %vm891, %v1099, 0.0
        %1110 = vadd.xlane.f32.xlu0 %v1109
        %v1111 = vpop.xlane.xlu0 %1110
        %v1112 = vrcp.pop %v1102
        %v1113 = vrcp.pop %v1105
        %v1114 = vrcp.pop %v1108
        %v1115 = vrcp.pop %v1111
        %v1116 = vmul.f32 %v1093, %v1112
        %v1117 = vmul.f32 %v1095, %v1113
        %v1118 = vmul.f32 %v1097, %v1114
        %v1119 = vmul.f32 %v1099, %v1115
        %v1120 = vpack.c.bf16 %v1116, %v1116
        %v1121 = vpack.c.bf16 %v1117, %v1117
        %v1122 = vpack.c.bf16 %v1118, %v1118
        %v1123 = vpack.c.bf16 %v1119, %v1119
        %1124 = vxpose.xlu0.c.b16.start [1/8] %v668, 128
        %1125 = vxpose.xlu0.c.b16.cont [2/8] 0, 128
        %1126 = vxpose.xlu0.c.b16.cont [3/8] 0, 128
        %1127 = vxpose.xlu0.c.b16.cont [4/8] 0, 128
        %1128 = vxpose.xlu0.c.b16.cont [5/8] 0, 128
        %1129 = vxpose.xlu0.c.b16.cont [6/8] 0, 128
        %1130 = vxpose.xlu0.c.b16.cont [7/8] 0, 128
        %1131 = vxpose.xlu0.c.b16.end [8/8] 0, 128
        %v1132 = vpop.trf.xlu0
        %v1133 = vpop.trf.xlu0
        %v1134 = vpop.trf.xlu0
        %v1135 = vpop.trf.xlu0
        %v1136 = vpop.trf.xlu0
        %v1137 = vpop.trf.xlu0
        %v1138 = vpop.trf.xlu0
        %v1139 = vpop.trf.xlu0
        %v1141 = vsel %vm891, %v1132, 0
        %v1144 = vsel %vm891, %v1120, 0
        %1146 = vmatprep.subr.bf16.mxu0 0
        %1147 = vmatpush1.bf16.xpose.msra.mxu0 %v1144
        %1148 = vmatprep.subr.bf16.mxu0 0
        %1149 = vmatpush1.bf16.xpose.msra.mxu0 0
        %1150 = vmatprep.subr.bf16.mxu0 0
        %1151 = vmatpush1.bf16.xpose.msra.mxu0 0
        %1152 = vmatprep.subr.bf16.mxu0 0
        %1153 = vmatpush1.bf16.xpose.msra.mxu0 0
        %1154 = vmatprep.subr.bf16.mxu0 0
        %1155 = vmatpush1.bf16.xpose.msra.mxu0 0
        %1156 = vmatprep.subr.bf16.mxu0 0
        %1157 = vmatpush1.bf16.xpose.msra.mxu0 0
        %1158 = vmatprep.subr.bf16.mxu0 0
        %1159 = vmatpush1.bf16.xpose.msra.mxu0 0
        %1160 = vmatprep.subr.bf16.mxu0 0
        %1161 = vmatpush1.bf16.xpose.msra.mxu0 0
        %1162 = vmatprep.subr.bf16.mxu0 0
        %1163 = vmatpush1.bf16.xpose.msra.mxu0 0
        %1164 = vmatprep.subr.bf16.mxu0 0
        %1165 = vmatpush1.bf16.xpose.msra.mxu0 0
        %1166 = vmatprep.subr.bf16.mxu0 0
        %1167 = vmatpush1.bf16.xpose.msra.mxu0 0
        %1168 = vmatprep.subr.bf16.mxu0 0
        %1169 = vmatpush1.bf16.xpose.msra.mxu0 0
        %1170 = vmatprep.subr.bf16.mxu0 0
        %1171 = vmatpush1.bf16.xpose.msra.mxu0 0
        %1172 = vmatprep.subr.bf16.mxu0 0
        %1173 = vmatpush1.bf16.xpose.msra.mxu0 0
        %1174 = vmatprep.subr.bf16.mxu0 0
        %1175 = vmatpush1.bf16.xpose.msra.mxu0 0
        %1176 = vmatprep.subr.bf16.mxu0 0
        %1177 = vmatpush1.bf16.xpose.msra.mxu0 0
        %1178 = vmatprep.mubr.bf16.mxu0 0
        %1179 = vmatmul.mubr.bf16.gmra.mrb[0].mxu0 %v1141
        %v1180 = vpop.f32.mrb[0].mxu0
        %v1181 = vadd.f32 0.0, %v1180
        %v1182 = vpop.f32.mrb[0].mxu0
        %v1183 = vpop.f32.mrb[0].mxu0
        %v1184 = vpop.f32.mrb[0].mxu0
        %1185 = vdwg.mxu0
        %1186 = vxpose.xlu0.c.b16.start [1/8] %v669, 128
        %1187 = vxpose.xlu0.c.b16.cont [2/8] 0, 128
        %1188 = vxpose.xlu0.c.b16.cont [3/8] 0, 128
        %1189 = vxpose.xlu0.c.b16.cont [4/8] 0, 128
        %1190 = vxpose.xlu0.c.b16.cont [5/8] 0, 128
        %1191 = vxpose.xlu0.c.b16.cont [6/8] 0, 128
        %1192 = vxpose.xlu0.c.b16.cont [7/8] 0, 128
        %1193 = vxpose.xlu0.c.b16.end [8/8] 0, 128
        %v1194 = vpop.trf.xlu0
        %v1195 = vpop.trf.xlu0
        %v1196 = vpop.trf.xlu0
        %v1197 = vpop.trf.xlu0
        %v1198 = vpop.trf.xlu0
        %v1199 = vpop.trf.xlu0
        %v1200 = vpop.trf.xlu0
        %v1201 = vpop.trf.xlu0
        %v1203 = vsel %vm891, %v1194, 0
        %v1206 = vsel %vm891, %v1121, 0
        %1208 = vmatprep.subr.bf16.mxu0 0
        %1209 = vmatpush1.bf16.xpose.msra.mxu0 %v1206
        %1210 = vmatprep.subr.bf16.mxu0 0
        %1211 = vmatpush1.bf16.xpose.msra.mxu0 0
        %1212 = vmatprep.subr.bf16.mxu0 0
        %1213 = vmatpush1.bf16.xpose.msra.mxu0 0
        %1214 = vmatprep.subr.bf16.mxu0 0
        %1215 = vmatpush1.bf16.xpose.msra.mxu0 0
        %1216 = vmatprep.subr.bf16.mxu0 0
        %1217 = vmatpush1.bf16.xpose.msra.mxu0 0
        %1218 = vmatprep.subr.bf16.mxu0 0
        %1219 = vmatpush1.bf16.xpose.msra.mxu0 0
        %1220 = vmatprep.subr.bf16.mxu0 0
        %1221 = vmatpush1.bf16.xpose.msra.mxu0 0
        %1222 = vmatprep.subr.bf16.mxu0 0
        %1223 = vmatpush1.bf16.xpose.msra.mxu0 0
        %1224 = vmatprep.subr.bf16.mxu0 0
        %1225 = vmatpush1.bf16.xpose.msra.mxu0 0
        %1226 = vmatprep.subr.bf16.mxu0 0
        %1227 = vmatpush1.bf16.xpose.msra.mxu0 0
        %1228 = vmatprep.subr.bf16.mxu0 0
        %1229 = vmatpush1.bf16.xpose.msra.mxu0 0
        %1230 = vmatprep.subr.bf16.mxu0 0
        %1231 = vmatpush1.bf16.xpose.msra.mxu0 0
        %1232 = vmatprep.subr.bf16.mxu0 0
        %1233 = vmatpush1.bf16.xpose.msra.mxu0 0
        %1234 = vmatprep.subr.bf16.mxu0 0
        %1235 = vmatpush1.bf16.xpose.msra.mxu0 0
        %1236 = vmatprep.subr.bf16.mxu0 0
        %1237 = vmatpush1.bf16.xpose.msra.mxu0 0
        %1238 = vmatprep.subr.bf16.mxu0 0
        %1239 = vmatpush1.bf16.xpose.msra.mxu0 0
        %1240 = vmatprep.mubr.bf16.mxu0 0
        %1241 = vmatmul.mubr.bf16.gmra.mrb[0].mxu0 %v1203
        %v1242 = vpop.f32.mrb[0].mxu0
        %v1243 = vadd.f32 0.0, %v1242
        %v1244 = vpop.f32.mrb[0].mxu0
        %v1245 = vpop.f32.mrb[0].mxu0
        %v1246 = vpop.f32.mrb[0].mxu0
        %1247 = vdwg.mxu0
        %1248 = vxpose.xlu0.c.b16.start [1/8] %v670, 128
        %1249 = vxpose.xlu0.c.b16.cont [2/8] 0, 128
        %1250 = vxpose.xlu0.c.b16.cont [3/8] 0, 128
        %1251 = vxpose.xlu0.c.b16.cont [4/8] 0, 128
        %1252 = vxpose.xlu0.c.b16.cont [5/8] 0, 128
        %1253 = vxpose.xlu0.c.b16.cont [6/8] 0, 128
        %1254 = vxpose.xlu0.c.b16.cont [7/8] 0, 128
        %1255 = vxpose.xlu0.c.b16.end [8/8] 0, 128
        %v1256 = vpop.trf.xlu0
        %v1257 = vpop.trf.xlu0
        %v1258 = vpop.trf.xlu0
        %v1259 = vpop.trf.xlu0
        %v1260 = vpop.trf.xlu0
        %v1261 = vpop.trf.xlu0
        %v1262 = vpop.trf.xlu0
        %v1263 = vpop.trf.xlu0
        %v1265 = vsel %vm891, %v1256, 0
        %v1268 = vsel %vm891, %v1122, 0
        %1270 = vmatprep.subr.bf16.mxu0 0
        %1271 = vmatpush1.bf16.xpose.msra.mxu0 %v1268
        %1272 = vmatprep.subr.bf16.mxu0 0
        %1273 = vmatpush1.bf16.xpose.msra.mxu0 0
        %1274 = vmatprep.subr.bf16.mxu0 0
        %1275 = vmatpush1.bf16.xpose.msra.mxu0 0
        %1276 = vmatprep.subr.bf16.mxu0 0
        %1277 = vmatpush1.bf16.xpose.msra.mxu0 0
        %1278 = vmatprep.subr.bf16.mxu0 0
        %1279 = vmatpush1.bf16.xpose.msra.mxu0 0
        %1280 = vmatprep.subr.bf16.mxu0 0
        %1281 = vmatpush1.bf16.xpose.msra.mxu0 0
        %1282 = vmatprep.subr.bf16.mxu0 0
        %1283 = vmatpush1.bf16.xpose.msra.mxu0 0
        %1284 = vmatprep.subr.bf16.mxu0 0
        %1285 = vmatpush1.bf16.xpose.msra.mxu0 0
        %1286 = vmatprep.subr.bf16.mxu0 0
        %1287 = vmatpush1.bf16.xpose.msra.mxu0 0
        %1288 = vmatprep.subr.bf16.mxu0 0
        %1289 = vmatpush1.bf16.xpose.msra.mxu0 0
        %1290 = vmatprep.subr.bf16.mxu0 0
        %1291 = vmatpush1.bf16.xpose.msra.mxu0 0
        %1292 = vmatprep.subr.bf16.mxu0 0
        %1293 = vmatpush1.bf16.xpose.msra.mxu0 0
        %1294 = vmatprep.subr.bf16.mxu0 0
        %1295 = vmatpush1.bf16.xpose.msra.mxu0 0
        %1296 = vmatprep.subr.bf16.mxu0 0
        %1297 = vmatpush1.bf16.xpose.msra.mxu0 0
        %1298 = vmatprep.subr.bf16.mxu0 0
        %1299 = vmatpush1.bf16.xpose.msra.mxu0 0
        %1300 = vmatprep.subr.bf16.mxu0 0
        %1301 = vmatpush1.bf16.xpose.msra.mxu0 0
        %1302 = vmatprep.mubr.bf16.mxu0 0
        %1303 = vmatmul.mubr.bf16.gmra.mrb[0].mxu0 %v1265
        %v1304 = vpop.f32.mrb[0].mxu0
        %v1305 = vadd.f32 0.0, %v1304
        %v1306 = vpop.f32.mrb[0].mxu0
        %v1307 = vpop.f32.mrb[0].mxu0
        %v1308 = vpop.f32.mrb[0].mxu0
        %1309 = vdwg.mxu0
        %1310 = vxpose.xlu0.c.b16.start [1/8] %v671, 128
        %1311 = vxpose.xlu0.c.b16.cont [2/8] 0, 128
        %1312 = vxpose.xlu0.c.b16.cont [3/8] 0, 128
        %1313 = vxpose.xlu0.c.b16.cont [4/8] 0, 128
        %1314 = vxpose.xlu0.c.b16.cont [5/8] 0, 128
        %1315 = vxpose.xlu0.c.b16.cont [6/8] 0, 128
        %1316 = vxpose.xlu0.c.b16.cont [7/8] 0, 128
        %1317 = vxpose.xlu0.c.b16.end [8/8] 0, 128
        %v1318 = vpop.trf.xlu0
        %v1319 = vpop.trf.xlu0
        %v1320 = vpop.trf.xlu0
        %v1321 = vpop.trf.xlu0
        %v1322 = vpop.trf.xlu0
        %v1323 = vpop.trf.xlu0
        %v1324 = vpop.trf.xlu0
        %v1325 = vpop.trf.xlu0
        %v1327 = vsel %vm891, %v1318, 0
        %v1330 = vsel %vm891, %v1123, 0
        %1332 = vmatprep.subr.bf16.mxu0 0
        %1333 = vmatpush1.bf16.xpose.msra.mxu0 %v1330
        %1334 = vmatprep.subr.bf16.mxu0 0
        %1335 = vmatpush1.bf16.xpose.msra.mxu0 0
        %1336 = vmatprep.subr.bf16.mxu0 0
        %1337 = vmatpush1.bf16.xpose.msra.mxu0 0
        %1338 = vmatprep.subr.bf16.mxu0 0
        %1339 = vmatpush1.bf16.xpose.msra.mxu0 0
        %1340 = vmatprep.subr.bf16.mxu0 0
        %1341 = vmatpush1.bf16.xpose.msra.mxu0 0
        %1342 = vmatprep.subr.bf16.mxu0 0
        %1343 = vmatpush1.bf16.xpose.msra.mxu0 0
        %1344 = vmatprep.subr.bf16.mxu0 0
        %1345 = vmatpush1.bf16.xpose.msra.mxu0 0
        %1346 = vmatprep.subr.bf16.mxu0 0
        %1347 = vmatpush1.bf16.xpose.msra.mxu0 0
        %1348 = vmatprep.subr.bf16.mxu0 0
        %1349 = vmatpush1.bf16.xpose.msra.mxu0 0
        %1350 = vmatprep.subr.bf16.mxu0 0
        %1351 = vmatpush1.bf16.xpose.msra.mxu0 0
        %1352 = vmatprep.subr.bf16.mxu0 0
        %1353 = vmatpush1.bf16.xpose.msra.mxu0 0
        %1354 = vmatprep.subr.bf16.mxu0 0
        %1355 = vmatpush1.bf16.xpose.msra.mxu0 0
        %1356 = vmatprep.subr.bf16.mxu0 0
        %1357 = vmatpush1.bf16.xpose.msra.mxu0 0
        %1358 = vmatprep.subr.bf16.mxu0 0
        %1359 = vmatpush1.bf16.xpose.msra.mxu0 0
        %1360 = vmatprep.subr.bf16.mxu0 0
        %1361 = vmatpush1.bf16.xpose.msra.mxu0 0
        %1362 = vmatprep.subr.bf16.mxu0 0
        %1363 = vmatpush1.bf16.xpose.msra.mxu0 0
        %1364 = vmatprep.mubr.bf16.mxu0 0
        %1365 = vmatmul.mubr.bf16.gmra.mrb[0].mxu0 %v1327
        %v1366 = vpop.f32.mrb[0].mxu0
        %v1367 = vadd.f32 0.0, %v1366
        %v1368 = vpop.f32.mrb[0].mxu0
        %v1369 = vpop.f32.mrb[0].mxu0
        %v1370 = vpop.f32.mrb[0].mxu0
        %1371 = vdwg.mxu0
        %1372 = vxpose.xlu0.b32.start [1/16] %v1181, 128
        %1373 = vxpose.xlu0.b32.cont [2/16] 0.0, 128
        %1374 = vxpose.xlu0.b32.cont [3/16] 0.0, 128
        %1375 = vxpose.xlu0.b32.cont [4/16] 0.0, 128
        %1376 = vxpose.xlu0.b32.cont [5/16] 0.0, 128
        %1377 = vxpose.xlu0.b32.cont [6/16] 0.0, 128
        %1378 = vxpose.xlu0.b32.cont [7/16] 0.0, 128
        %1379 = vxpose.xlu0.b32.cont [8/16] 0.0, 128
        %1380 = vxpose.xlu0.b32.cont [9/16] 0.0, 128
        %1381 = vxpose.xlu0.b32.cont [10/16] 0.0, 128
        %1382 = vxpose.xlu0.b32.cont [11/16] 0.0, 128
        %1383 = vxpose.xlu0.b32.cont [12/16] 0.0, 128
        %1384 = vxpose.xlu0.b32.cont [13/16] 0.0, 128
        %1385 = vxpose.xlu0.b32.cont [14/16] 0.0, 128
        %1386 = vxpose.xlu0.b32.cont [15/16] 0.0, 128
        %1387 = vxpose.xlu0.b32.end [16/16] 0.0, 128
        %v1388 = vpop.trf.xlu0
        %v1389 = vpop.trf.xlu0
        %v1390 = vpop.trf.xlu0
        %v1391 = vpop.trf.xlu0
        %v1392 = vpop.trf.xlu0
        %v1393 = vpop.trf.xlu0
        %v1394 = vpop.trf.xlu0
        %v1395 = vpop.trf.xlu0
        %v1396 = vpop.trf.xlu0
        %v1397 = vpop.trf.xlu0
        %v1398 = vpop.trf.xlu0
        %v1399 = vpop.trf.xlu0
        %v1400 = vpop.trf.xlu0
        %v1401 = vpop.trf.xlu0
        %v1402 = vpop.trf.xlu0
        %v1403 = vpop.trf.xlu0
        %1404 = vxpose.xlu0.b32.start [1/16] %v1243, 128
        %1405 = vxpose.xlu0.b32.cont [2/16] 0.0, 128
        %1406 = vxpose.xlu0.b32.cont [3/16] 0.0, 128
        %1407 = vxpose.xlu0.b32.cont [4/16] 0.0, 128
        %1408 = vxpose.xlu0.b32.cont [5/16] 0.0, 128
        %1409 = vxpose.xlu0.b32.cont [6/16] 0.0, 128
        %1410 = vxpose.xlu0.b32.cont [7/16] 0.0, 128
        %1411 = vxpose.xlu0.b32.cont [8/16] 0.0, 128
        %1412 = vxpose.xlu0.b32.cont [9/16] 0.0, 128
        %1413 = vxpose.xlu0.b32.cont [10/16] 0.0, 128
        %1414 = vxpose.xlu0.b32.cont [11/16] 0.0, 128
        %1415 = vxpose.xlu0.b32.cont [12/16] 0.0, 128
        %1416 = vxpose.xlu0.b32.cont [13/16] 0.0, 128
        %1417 = vxpose.xlu0.b32.cont [14/16] 0.0, 128
        %1418 = vxpose.xlu0.b32.cont [15/16] 0.0, 128
        %1419 = vxpose.xlu0.b32.end [16/16] 0.0, 128
        %v1420 = vpop.trf.xlu0
        %v1421 = vpop.trf.xlu0
        %v1422 = vpop.trf.xlu0
        %v1423 = vpop.trf.xlu0
        %v1424 = vpop.trf.xlu0
        %v1425 = vpop.trf.xlu0
        %v1426 = vpop.trf.xlu0
        %v1427 = vpop.trf.xlu0
        %v1428 = vpop.trf.xlu0
        %v1429 = vpop.trf.xlu0
        %v1430 = vpop.trf.xlu0
        %v1431 = vpop.trf.xlu0
        %v1432 = vpop.trf.xlu0
        %v1433 = vpop.trf.xlu0
        %v1434 = vpop.trf.xlu0
        %v1435 = vpop.trf.xlu0
        %1436 = vxpose.xlu0.b32.start [1/16] %v1305, 128
        %1437 = vxpose.xlu0.b32.cont [2/16] 0.0, 128
        %1438 = vxpose.xlu0.b32.cont [3/16] 0.0, 128
        %1439 = vxpose.xlu0.b32.cont [4/16] 0.0, 128
        %1440 = vxpose.xlu0.b32.cont [5/16] 0.0, 128
        %1441 = vxpose.xlu0.b32.cont [6/16] 0.0, 128
        %1442 = vxpose.xlu0.b32.cont [7/16] 0.0, 128
        %1443 = vxpose.xlu0.b32.cont [8/16] 0.0, 128
        %1444 = vxpose.xlu0.b32.cont [9/16] 0.0, 128
        %1445 = vxpose.xlu0.b32.cont [10/16] 0.0, 128
        %1446 = vxpose.xlu0.b32.cont [11/16] 0.0, 128
        %1447 = vxpose.xlu0.b32.cont [12/16] 0.0, 128
        %1448 = vxpose.xlu0.b32.cont [13/16] 0.0, 128
        %1449 = vxpose.xlu0.b32.cont [14/16] 0.0, 128
        %1450 = vxpose.xlu0.b32.cont [15/16] 0.0, 128
        %1451 = vxpose.xlu0.b32.end [16/16] 0.0, 128
        %v1452 = vpop.trf.xlu0
        %v1453 = vpop.trf.xlu0
        %v1454 = vpop.trf.xlu0
        %v1455 = vpop.trf.xlu0
        %v1456 = vpop.trf.xlu0
        %v1457 = vpop.trf.xlu0
        %v1458 = vpop.trf.xlu0
        %v1459 = vpop.trf.xlu0
        %v1460 = vpop.trf.xlu0
        %v1461 = vpop.trf.xlu0
        %v1462 = vpop.trf.xlu0
        %v1463 = vpop.trf.xlu0
        %v1464 = vpop.trf.xlu0
        %v1465 = vpop.trf.xlu0
        %v1466 = vpop.trf.xlu0
        %v1467 = vpop.trf.xlu0
        %1468 = vxpose.xlu0.b32.start [1/16] %v1367, 128
        %1469 = vxpose.xlu0.b32.cont [2/16] 0.0, 128
        %1470 = vxpose.xlu0.b32.cont [3/16] 0.0, 128
        %1471 = vxpose.xlu0.b32.cont [4/16] 0.0, 128
        %1472 = vxpose.xlu0.b32.cont [5/16] 0.0, 128
        %1473 = vxpose.xlu0.b32.cont [6/16] 0.0, 128
        %1474 = vxpose.xlu0.b32.cont [7/16] 0.0, 128
        %1475 = vxpose.xlu0.b32.cont [8/16] 0.0, 128
        %1476 = vxpose.xlu0.b32.cont [9/16] 0.0, 128
        %1477 = vxpose.xlu0.b32.cont [10/16] 0.0, 128
        %1478 = vxpose.xlu0.b32.cont [11/16] 0.0, 128
        %1479 = vxpose.xlu0.b32.cont [12/16] 0.0, 128
        %1480 = vxpose.xlu0.b32.cont [13/16] 0.0, 128
        %1481 = vxpose.xlu0.b32.cont [14/16] 0.0, 128
        %1482 = vxpose.xlu0.b32.cont [15/16] 0.0, 128
        %1483 = vxpose.xlu0.b32.end [16/16] 0.0, 128
        %v1484 = vpop.trf.xlu0
        %v1485 = vpop.trf.xlu0
        %v1486 = vpop.trf.xlu0
        %v1487 = vpop.trf.xlu0
        %v1488 = vpop.trf.xlu0
        %v1489 = vpop.trf.xlu0
        %v1490 = vpop.trf.xlu0
        %v1491 = vpop.trf.xlu0
        %v1492 = vpop.trf.xlu0
        %v1493 = vpop.trf.xlu0
        %v1494 = vpop.trf.xlu0
        %v1495 = vpop.trf.xlu0
        %v1496 = vpop.trf.xlu0
        %v1497 = vpop.trf.xlu0
        %v1498 = vpop.trf.xlu0
        %v1499 = vpop.trf.xlu0
        %v1500 = vcombine.low %v1388, %v1452
        %v1501 = vcombine.high %v1388, %v1452
        %v1503 = vunpack.c.l.s4 1983009808
        %v1504 = vunpack.c.0.s8 %v1503
        %v1505 = vlaneseq
        %v1506 = vshrl.u32 %v1505, 7
        %v1507 = vsub.s32 %v1504, %v1506
        %v1508 = vrot.slane %v1500, %v1507
        %v1510 = vunpack.c.l.s4 1983009808
        %v1511 = vunpack.c.0.s8 %v1510
        %v1512 = vlaneseq
        %v1513 = vshrl.u32 %v1512, 7
        %v1514 = vsub.s32 %v1511, %v1513
        %v1515 = vrot.slane %v1501, %v1514
        %v1516 = vcombine.low %v1420, %v1484
        %v1517 = vcombine.high %v1420, %v1484
        %v1519 = vunpack.c.l.s4 1983009808
        %v1520 = vunpack.c.0.s8 %v1519
        %v1521 = vlaneseq
        %v1522 = vshrl.u32 %v1521, 7
        %v1523 = vsub.s32 %v1520, %v1522
        %v1524 = vrot.slane %v1516, %v1523
        %v1526 = vunpack.c.l.s4 1983009808
        %v1527 = vunpack.c.0.s8 %v1526
        %v1528 = vlaneseq
        %v1529 = vshrl.u32 %v1528, 7
        %v1530 = vsub.s32 %v1527, %v1529
        %v1531 = vrot.slane %v1517, %v1530
        %v1532 = vcombine.low %v1508, %v1524
        %v1533 = vcombine.high %v1508, %v1524
        %v1535 = vunpack.c.l.s4 1934713408
        %v1536 = vunpack.c.0.s8 %v1535
        %v1537 = vlaneseq
        %v1538 = vshrl.u32 %v1537, 7
        %v1539 = vsub.s32 %v1536, %v1538
        %v1540 = vrot.slane %v1532, %v1539
        %v1542 = vunpack.c.l.s4 1934713408
        %v1543 = vunpack.c.0.s8 %v1542
        %v1544 = vlaneseq
        %v1545 = vshrl.u32 %v1544, 7
        %v1546 = vsub.s32 %v1543, %v1545
        %v1547 = vrot.slane %v1533, %v1546
        %v1548 = vcombine.low %v1515, %v1531
        %v1549 = vcombine.high %v1515, %v1531
        %v1551 = vunpack.c.l.s4 1934713408
        %v1552 = vunpack.c.0.s8 %v1551
        %v1553 = vlaneseq
        %v1554 = vshrl.u32 %v1553, 7
        %v1555 = vsub.s32 %v1552, %v1554
        %v1556 = vrot.slane %v1548, %v1555
        %v1558 = vunpack.c.l.s4 1934713408
        %v1559 = vunpack.c.0.s8 %v1558
        %v1560 = vlaneseq
        %v1561 = vshrl.u32 %v1560, 7
        %v1562 = vsub.s32 %v1559, %v1561
        %v1563 = vrot.slane %v1549, %v1562
        %v1564 = vcombine.high %v1540, 0.0
        %v1565 = vcombine.high %v1547, 0.0
        %v1566 = vcombine.high %v1556, 0.0
        %v1567 = vcombine.high %v1563, 0.0
        %v1568 = vcombine.low %v1540, %v1547
        %v1570 = vunpack.c.l.s4 1983009808
        %v1571 = vunpack.c.0.s8 %v1570
        %v1572 = vlaneseq
        %v1573 = vshrl.u32 %v1572, 7
        %v1574 = vsub.s32 %v1571, %v1573
        %v1575 = vrot.slane %v1568, %v1574
        %v1576 = vcombine.low %v1564, %v1565
        %v1578 = vunpack.c.l.s4 1983009808
        %v1579 = vunpack.c.0.s8 %v1578
        %v1580 = vlaneseq
        %v1581 = vshrl.u32 %v1580, 7
        %v1582 = vsub.s32 %v1579, %v1581
        %v1583 = vrot.slane %v1576, %v1582
        %v1584 = vcombine.low %v1556, %v1563
        %v1586 = vunpack.c.l.s4 1983009808
        %v1587 = vunpack.c.0.s8 %v1586
        %v1588 = vlaneseq
        %v1589 = vshrl.u32 %v1588, 7
        %v1590 = vsub.s32 %v1587, %v1589
        %v1591 = vrot.slane %v1584, %v1590
        %v1592 = vcombine.low %v1566, %v1567
        %v1594 = vunpack.c.l.s4 1983009808
        %v1595 = vunpack.c.0.s8 %v1594
        %v1596 = vlaneseq
        %v1597 = vshrl.u32 %v1596, 7
        %v1598 = vsub.s32 %v1595, %v1597
        %v1599 = vrot.slane %v1592, %v1598
        %v1600 = vcombine.low %v1575, %v1583
        %v1601 = vcombine.high %v1575, %v1583
        %v1603 = vunpack.c.l.s4 1934713408
        %v1604 = vunpack.c.0.s8 %v1603
        %v1605 = vlaneseq
        %v1606 = vshrl.u32 %v1605, 7
        %v1607 = vsub.s32 %v1604, %v1606
        %v1608 = vrot.slane %v1600, %v1607
        %v1610 = vunpack.c.l.s4 1934713408
        %v1611 = vunpack.c.0.s8 %v1610
        %v1612 = vlaneseq
        %v1613 = vshrl.u32 %v1612, 7
        %v1614 = vsub.s32 %v1611, %v1613
        %v1615 = vrot.slane %v1601, %v1614
        %v1616 = vcombine.low %v1591, %v1599
        %v1617 = vcombine.high %v1591, %v1599
        %v1619 = vunpack.c.l.s4 1934713408
        %v1620 = vunpack.c.0.s8 %v1619
        %v1621 = vlaneseq
        %v1622 = vshrl.u32 %v1621, 7
        %v1623 = vsub.s32 %v1620, %v1622
        %v1624 = vrot.slane %v1616, %v1623
        %v1626 = vunpack.c.l.s4 1934713408
        %v1627 = vunpack.c.0.s8 %v1626
        %v1628 = vlaneseq
        %v1629 = vshrl.u32 %v1628, 7
        %v1630 = vsub.s32 %v1627, %v1629
        %v1631 = vrot.slane %v1617, %v1630
        %v1632 = vcombine.low %v1608, %v1624
        %v1633 = vcombine.high %v1608, %v1624
        %v1634 = vcombine.low %v1615, %v1631
        %v1635 = vcombine.high %v1615, %v1631
        %1637 = vrot.lane.b32.xlu0 %v1633, 8
        %v1638 = vpop.permute.xlu0 %1637
        %1641 = vrot.lane.b32.xlu0 %v1634, 16
        %v1642 = vpop.permute.xlu0 %1641
        %1645 = vrot.lane.b32.xlu0 %v1635, 24
        %v1646 = vpop.permute.xlu0 %1645
        %v1648 = vsel %vm891, %v1632, %v1638
        %vm1649 = vcmask 130048
        %v1650 = vsel %vm1649, %v1648, %v1642
        %vm1651 = vcmask 195584
        %v1652 = vsel %vm1651, %v1650, %v1646
        %v1653 = vpack.c.bf16 %v1652, %v1652
        %v1654 = vld [vmem:[%s6] sm:$0xf]
        %v1655 = vld [vmem:[%s6 + $0x4] sm:$0xf]
        %v1656 = vld [vmem:[%s6 + $0x8] sm:$0xf]
        %v1657 = vld [vmem:[%s6 + $0xc] sm:$0xf]
        %v1658 = vld [vmem:[%s7] sm:$0x1]
        %v1660 = vlaneseq
        %v1661 = vshrl.u32 %v1660, 7
        %v1662 = vsub.s32 0, %v1661
        %v1663 = vrot.slane %v1658, %v1662
        %v1669 = vunpack.c.l.b16 %v1654
        %v1670 = vunpack.c.l.b16 %v1655
        %v1671 = vunpack.c.l.b16 %v1656
        %v1672 = vunpack.c.l.b16 %v1657
        %v1673 = vpack.c.b16 %v1670, %v1669
        %v1674 = vpack.c.b16 %v1672, %v1671
        %v1678 = vsel %vm698, %v1653, 0
        %1680 = vmatprep.subr.bf16.mxu0 0
        %1681 = vmatpush1.bf16.msra.mxu0 %v1673
        %1682 = vmatprep.subr.bf16.mxu0 0
        %1683 = vmatpush1.bf16.msra.mxu0 %v1674
        %1684 = vmatprep.subr.bf16.mxu0 0
        %1685 = vmatpush1.bf16.msra.mxu0 0
        %1686 = vmatprep.subr.bf16.mxu0 0
        %1687 = vmatpush1.bf16.msra.mxu0 0
        %1688 = vmatprep.subr.bf16.mxu0 0
        %1689 = vmatpush1.bf16.msra.mxu0 0
        %1690 = vmatprep.subr.bf16.mxu0 0
        %1691 = vmatpush1.bf16.msra.mxu0 0
        %1692 = vmatprep.subr.bf16.mxu0 0
        %1693 = vmatpush1.bf16.msra.mxu0 0
        %1694 = vmatprep.subr.bf16.mxu0 0
        %1695 = vmatpush1.bf16.msra.mxu0 0
        %1696 = vmatprep.subr.bf16.mxu0 0
        %1697 = vmatpush1.bf16.msra.mxu0 0
        %1698 = vmatprep.subr.bf16.mxu0 0
        %1699 = vmatpush1.bf16.msra.mxu0 0
        %1700 = vmatprep.subr.bf16.mxu0 0
        %1701 = vmatpush1.bf16.msra.mxu0 0
        %1702 = vmatprep.subr.bf16.mxu0 0
        %1703 = vmatpush1.bf16.msra.mxu0 0
        %1704 = vmatprep.subr.bf16.mxu0 0
        %1705 = vmatpush1.bf16.msra.mxu0 0
        %1706 = vmatprep.subr.bf16.mxu0 0
        %1707 = vmatpush1.bf16.msra.mxu0 0
        %1708 = vmatprep.subr.bf16.mxu0 0
        %1709 = vmatpush1.bf16.msra.mxu0 0
        %1710 = vmatprep.subr.bf16.mxu0 0
        %1711 = vmatpush1.bf16.msra.mxu0 0
        %1712 = vmatprep.mubr.bf16.mxu0 0
        %1713 = vmatmul.mubr.bf16.gmra.mrb[0].mxu0 %v1678
        %v1714 = vpop.f32.mrb[0].mxu0
        %v1715 = vadd.f32 %v1663, %v1714
        %v1716 = vpop.f32.mrb[0].mxu0
        %v1717 = vpop.f32.mrb[0].mxu0
        %v1718 = vpop.f32.mrb[0].mxu0
        %1719 = vdwg.mxu0
        %v1720 = vadd.f32 %v1715, %v663
        %v1721 = vld [vmem:[#allocation7] sm:$0x1]
        %v1722 = vld [vmem:[#allocation8] sm:$0x1]
        %v1723 = vsel %vm698, %v1720, 0.0
        %1724 = vadd.xlane.f32.xlu0 %v1723
        %v1725 = vpop.xlane.xlu0 %1724
        %v1726 = vrcp.pop 32.0
        %v1727 = vmul.f32 %v1725, %v1726
        %v1728 = vsub.f32 %v1720, %v1727
        %v1729 = vmul.f32 %v1728, %v1728
        %v1730 = vsel %vm698, %v1729, 0.0
        %1731 = vadd.xlane.f32.xlu0 %v1730
        %v1732 = vpop.xlane.xlu0 %1731
        %v1733 = vmul.f32 %v1732, %v1726
        %v1734 = vadd.f32 %v1733, 1e-12
        %v1735 = vrsqrt.pop %v1734
        %v1736 = vmul.f32 %v1728, %v1735
        %v1738 = vlaneseq
        %v1739 = vshrl.u32 %v1738, 7
        %v1740 = vsub.s32 0, %v1739
        %v1741 = vrot.slane %v1721, %v1740
        %v1743 = vmul.f32 %v1736, %v1741
        %v1745 = vlaneseq
        %v1746 = vshrl.u32 %v1745, 7
        %v1747 = vsub.s32 0, %v1746
        %v1748 = vrot.slane %v1722, %v1747
        %v1750 = vadd.f32 %v1743, %v1748
        %v1751 = vpack.c.bf16 %v1750, %v1750
        %v1752 = vld [vmem:[%s10] sm:$0xf]
        %v1753 = vld [vmem:[%s10 + $0x4] sm:$0xf]
        %v1754 = vld [vmem:[%s10 + $0x8] sm:$0xf]
        %v1755 = vld [vmem:[%s10 + $0xc] sm:$0xf]
        %v1756 = vld [vmem:[%s11] sm:$0x1]
        %v1758 = vlaneseq
        %v1759 = vshrl.u32 %v1758, 7
        %v1760 = vsub.s32 0, %v1759
        %v1761 = vrot.slane %v1756, %v1760
        %v1767 = vunpack.c.l.b16 %v1752
        %v1768 = vunpack.c.l.b16 %v1753
        %v1769 = vunpack.c.l.b16 %v1754
        %v1770 = vunpack.c.l.b16 %v1755
        %v1771 = vpack.c.b16 %v1768, %v1767
        %v1772 = vpack.c.b16 %v1770, %v1769
        %v1776 = vsel %vm698, %v1751, 0
        %1778 = vmatprep.subr.bf16.mxu0 0
        %1779 = vmatpush1.bf16.msra.mxu0 %v1771
        %1780 = vmatprep.subr.bf16.mxu0 0
        %1781 = vmatpush1.bf16.msra.mxu0 %v1772
        %1782 = vmatprep.subr.bf16.mxu0 0
        %1783 = vmatpush1.bf16.msra.mxu0 0
        %1784 = vmatprep.subr.bf16.mxu0 0
        %1785 = vmatpush1.bf16.msra.mxu0 0
        %1786 = vmatprep.subr.bf16.mxu0 0
        %1787 = vmatpush1.bf16.msra.mxu0 0
        %1788 = vmatprep.subr.bf16.mxu0 0
        %1789 = vmatpush1.bf16.msra.mxu0 0
        %1790 = vmatprep.subr.bf16.mxu0 0
        %1791 = vmatpush1.bf16.msra.mxu0 0
        %1792 = vmatprep.subr.bf16.mxu0 0
        %1793 = vmatpush1.bf16.msra.mxu0 0
        %1794 = vmatprep.subr.bf16.mxu0 0
        %1795 = vmatpush1.bf16.msra.mxu0 0
        %1796 = vmatprep.subr.bf16.mxu0 0
        %1797 = vmatpush1.bf16.msra.mxu0 0
        %1798 = vmatprep.subr.bf16.mxu0 0
        %1799 = vmatpush1.bf16.msra.mxu0 0
        %1800 = vmatprep.subr.bf16.mxu0 0
        %1801 = vmatpush1.bf16.msra.mxu0 0
        %1802 = vmatprep.subr.bf16.mxu0 0
        %1803 = vmatpush1.bf16.msra.mxu0 0
        %1804 = vmatprep.subr.bf16.mxu0 0
        %1805 = vmatpush1.bf16.msra.mxu0 0
        %1806 = vmatprep.subr.bf16.mxu0 0
        %1807 = vmatpush1.bf16.msra.mxu0 0
        %1808 = vmatprep.subr.bf16.mxu0 0
        %1809 = vmatpush1.bf16.msra.mxu0 0
        %1810 = vmatprep.mubr.bf16.mxu0 0
        %1811 = vmatmul.mubr.bf16.gmra.mrb[0].mxu0 %v1776
        %v1812 = vpop.f32.mrb[0].mxu0
        %v1813 = vadd.f32 %v1761, %v1812
        %v1814 = vpop.f32.mrb[0].mxu0
        %v1815 = vpop.f32.mrb[0].mxu0
        %v1816 = vpop.f32.mrb[0].mxu0
        %1817 = vdwg.mxu0
        %v1818 = vmul.f32 %v1813, 0.5
        %v1819 = vmul.f32 %v1813, 0.70710677
        %v1820 = verf.f32.pop %v1819
        %v1821 = vadd.f32 %v1820, 1.0
        %v1822 = vmul.f32 %v1818, %v1821
        %v1823 = vpack.c.bf16 %v1822, %v1822
        %v1824 = vld [vmem:[%s12] sm:$0xf]
        %v1825 = vld [vmem:[%s12 + $0x4] sm:$0xf]
        %v1826 = vld [vmem:[%s12 + $0x8] sm:$0xf]
        %v1827 = vld [vmem:[%s12 + $0xc] sm:$0xf]
        %v1828 = vld [vmem:[%s12 + $0x10] sm:$0xf]
        %v1829 = vld [vmem:[%s12 + $0x14] sm:$0xf]
        %v1830 = vld [vmem:[%s12 + $0x18] sm:$0xf]
        %v1831 = vld [vmem:[%s12 + $0x1c] sm:$0xf]
        %v1832 = vld [vmem:[%s12 + $0x20] sm:$0xf]
        %v1833 = vld [vmem:[%s12 + $0x24] sm:$0xf]
        %v1834 = vld [vmem:[%s12 + $0x28] sm:$0xf]
        %v1835 = vld [vmem:[%s12 + $0x2c] sm:$0xf]
        %v1836 = vld [vmem:[%s12 + $0x30] sm:$0xf]
        %v1837 = vld [vmem:[%s12 + $0x34] sm:$0xf]
        %v1838 = vld [vmem:[%s12 + $0x38] sm:$0xf]
        %v1839 = vld [vmem:[%s12 + $0x3c] sm:$0xf]
        %v1840 = vld [vmem:[%s13] sm:$0x1]
        %v1842 = vlaneseq
        %v1843 = vshrl.u32 %v1842, 7
        %v1844 = vsub.s32 0, %v1843
        %v1845 = vrot.slane %v1840, %v1844
        %v1863 = vunpack.c.l.b16 %v1824
        %v1864 = vunpack.c.l.b16 %v1825
        %v1865 = vunpack.c.l.b16 %v1826
        %v1866 = vunpack.c.l.b16 %v1827
        %v1867 = vunpack.c.l.b16 %v1828
        %v1868 = vunpack.c.l.b16 %v1829
        %v1869 = vunpack.c.l.b16 %v1830
        %v1870 = vunpack.c.l.b16 %v1831
        %v1871 = vunpack.c.l.b16 %v1832
        %v1872 = vunpack.c.l.b16 %v1833
        %v1873 = vunpack.c.l.b16 %v1834
        %v1874 = vunpack.c.l.b16 %v1835
        %v1875 = vunpack.c.l.b16 %v1836
        %v1876 = vunpack.c.l.b16 %v1837
        %v1877 = vunpack.c.l.b16 %v1838
        %v1878 = vunpack.c.l.b16 %v1839
        %v1879 = vpack.c.b16 %v1864, %v1863
        %v1880 = vpack.c.b16 %v1866, %v1865
        %v1881 = vpack.c.b16 %v1868, %v1867
        %v1882 = vpack.c.b16 %v1870, %v1869
        %v1883 = vpack.c.b16 %v1872, %v1871
        %v1884 = vpack.c.b16 %v1874, %v1873
        %v1885 = vpack.c.b16 %v1876, %v1875
        %v1886 = vpack.c.b16 %v1878, %v1877
        %1895 = vmatprep.subr.bf16.mxu0 0
        %1896 = vmatpush1.bf16.msra.mxu0 %v1879
        %1897 = vmatprep.subr.bf16.mxu0 0
        %1898 = vmatpush1.bf16.msra.mxu0 %v1880
        %1899 = vmatprep.subr.bf16.mxu0 0
        %1900 = vmatpush1.bf16.msra.mxu0 %v1881
        %1901 = vmatprep.subr.bf16.mxu0 0
        %1902 = vmatpush1.bf16.msra.mxu0 %v1882
        %1903 = vmatprep.subr.bf16.mxu0 0
        %1904 = vmatpush1.bf16.msra.mxu0 %v1883
        %1905 = vmatprep.subr.bf16.mxu0 0
        %1906 = vmatpush1.bf16.msra.mxu0 %v1884
        %1907 = vmatprep.subr.bf16.mxu0 0
        %1908 = vmatpush1.bf16.msra.mxu0 %v1885
        %1909 = vmatprep.subr.bf16.mxu0 0
        %1910 = vmatpush1.bf16.msra.mxu0 %v1886
        %1911 = vmatprep.subr.bf16.mxu0 0
        %1912 = vmatpush1.bf16.msra.mxu0 0
        %1913 = vmatprep.subr.bf16.mxu0 0
        %1914 = vmatpush1.bf16.msra.mxu0 0
        %1915 = vmatprep.subr.bf16.mxu0 0
        %1916 = vmatpush1.bf16.msra.mxu0 0
        %1917 = vmatprep.subr.bf16.mxu0 0
        %1918 = vmatpush1.bf16.msra.mxu0 0
        %1919 = vmatprep.subr.bf16.mxu0 0
        %1920 = vmatpush1.bf16.msra.mxu0 0
        %1921 = vmatprep.subr.bf16.mxu0 0
        %1922 = vmatpush1.bf16.msra.mxu0 0
        %1923 = vmatprep.subr.bf16.mxu0 0
        %1924 = vmatpush1.bf16.msra.mxu0 0
        %1925 = vmatprep.subr.bf16.mxu0 0
        %1926 = vmatpush1.bf16.msra.mxu0 0
        %1927 = vmatprep.mubr.bf16.mxu0 0
        %1928 = vmatmul.mubr.bf16.gmra.mrb[0].mxu0 %v1823
        %v1929 = vpop.f32.mrb[0].mxu0
        %v1930 = vadd.f32 %v1845, %v1929
        %v1931 = vpop.f32.mrb[0].mxu0
        %v1932 = vpop.f32.mrb[0].mxu0
        %v1933 = vpop.f32.mrb[0].mxu0
        %1934 = vdwg.mxu0
        %v1935 = vadd.f32 %v1930, %v1750
        %v1936 = vld [vmem:[%s14] sm:$0x1]
        %v1937 = vld [vmem:[%s15] sm:$0x1]
        %v1938 = vsel %vm698, %v1935, 0.0
        %1939 = vadd.xlane.f32.xlu0 %v1938
        %v1940 = vpop.xlane.xlu0 %1939
        %v1941 = vmul.f32 %v1940, %v1726
        %v1942 = vsub.f32 %v1935, %v1941
        %v1943 = vmul.f32 %v1942, %v1942
        %v1944 = vsel %vm698, %v1943, 0.0
        %1945 = vadd.xlane.f32.xlu0 %v1944
        %v1946 = vpop.xlane.xlu0 %1945
        %v1947 = vmul.f32 %v1946, %v1726
        %v1948 = vadd.f32 %v1947, 1e-12
        %v1949 = vrsqrt.pop %v1948
        %v1950 = vmul.f32 %v1942, %v1949
        %v1952 = vlaneseq
        %v1953 = vshrl.u32 %v1952, 7
        %v1954 = vsub.s32 0, %v1953
        %v1955 = vrot.slane %v1936, %v1954
        %v1957 = vmul.f32 %v1950, %v1955
        %v1959 = vlaneseq
        %v1960 = vshrl.u32 %v1959, 7
        %v1961 = vsub.s32 0, %v1960
        %v1962 = vrot.slane %v1937, %v1961
        %v1964 = vadd.f32 %v1957, %v1962
        %1965 = vst.msk [vmem:[%s644] sm:$0xff] %vm698, %v1964
        %s1966 = sand.u32 %s417, 1
        %s1967 = scalar_lea.sflag [#allocation4], %s1966
        %s1968 = sand.u32 %s417, 1
        %s1969 = smul.addr %s1968, 8
        %s1970 = scalar_lea.vmem [#allocation10], %s1969
        // Predicated region
        $region101: #{tpu_custom_call.1} parent=83 // pred_check
          %p1971 = pneg %p427
        $region102: #{tpu_custom_call.1} parent=83 // pred_check_branch
          %1973 = sbr.rel (%p1971) target = $region104
        $region103: #{tpu_custom_call.1} parent=83 // pred_region
          %s1975 = ssub.s32 128, 128
          %1976 = vsyncadd %s1967, %s1975
          %s1977 = sadd.s32 %s40, %s39
          %s1978 = smul.addr %s1977, 128
          %s1979 = scalar_lea.hbm %s16, %s1978
          %s1981 = sshll.u32 %s1970, 4
          %s1982 = int_to_ptr.vmem [resolvable:$true] %s1981
          %1984 = dma.vmem_to_hbm [thread:$0]  %s1982, 128, %s1979, %s1967
        $region104: #{tpu_custom_call.1} parent=83 // pred_fallthru
          _
      $region84: #{tpu_custom_call.1} parent=5 // pred_fallthru
        _
      %p1985 = scmp.le.s32.totalorder 2, %s30
      // Predicated region
      $region105: #{tpu_custom_call.1} parent=5 // pred_check
        %p1986 = pneg %p1985
      $region106: #{tpu_custom_call.1} parent=5 // pred_check_branch
        %1988 = sbr.rel (%p1986) target = $region108
      $region107: #{tpu_custom_call.1} parent=5 // pred_region
        %s1989 = ssub.s32 %s30, 2
        // Predicated region
        $region109: #{tpu_custom_call.1} parent=107 // pred_check
          %p1990 = pneg %p433
        $region110: #{tpu_custom_call.1} parent=107 // pred_check_branch
          %1992 = sbr.rel (%p1990) target = $region112
        $region111: #{tpu_custom_call.1} parent=107 // pred_region
          %s1993 = sand.u32 %s418, 1
          %s1994 = scalar_lea.sflag [#allocation4], %s1993
          %s1995 = sand.u32 %s418, 1
          %s1996 = smul.addr %s1995, 8
          %s1997 = scalar_lea.vmem [#allocation10], %s1996
          %1998 = dma.done %s1994, 128
        $region112: #{tpu_custom_call.1} parent=107 // pred_fallthru
          _
      $region108: #{tpu_custom_call.1} parent=5 // pred_fallthru
        _
    $region6: #{tpu_custom_call.1} parent=1 // loop_footer
      %s34 = sadd.s32 1, %s30
    $region7: #{tpu_custom_call.1} parent=1 // loop_footer_branch
      %29 = sbr.rel target = $region3
    $region8: #{tpu_custom_call.1} parent=1 // loop_exit
      _
    %1999 = vsyncpa [#allocation3], 1
    %s2000 = scalar_lea.sflag [#allocation3], 1
    %2001 = vsyncpa %s2000, 1
    %2002 = vsyncpa [#allocation6], 1
    %2003 = vsyncpa [#allocation9], 1
    %2004 = vsyncpa [#allocation4], 1
    %s2005 = scalar_lea.sflag [#allocation4], 1
    %2006 = vsyncpa %s2005, 1

</llo_original>
